<compile_context>
chip_gen: v7x
topology: tpu7x:2x2x1
jax: 0.10.0
libtpu: 0.0.40
codegen_flags: <defaults>
</compile_context>

<pallas_src>
import numpy as np
import jax
import jax.numpy as jnp
from jax import lax
from jax.experimental import pallas as pl
from jax.experimental.pallas import tpu as pltpu

HIDDEN = 50   # fixed by nn.LSTM(1, 50)
HPAD = 64     # hidden padded to a sublane-friendly size


def lstm_fc_kernel(gin_ref, whh_ref, fcw_ref, fcb_ref, out_ref, hist_scr):
    """LSTM recurrence (batch=1, gates fused) + final Linear, in one call.

    gin_ref : (T, 4*Hp)  precomputed x_t * W_ih + (b_ih + b_hh), per-gate padded
    whh_ref : (Hp, 4*Hp) fused, per-gate-transposed recurrent weights
    fcw_ref : (Hp, 128)  FC weights, real output column is lane 0
    fcb_ref : (1, 128)   FC bias in lane 0
    out_ref : (T, 128)   lane-dense output slab (lane 0 is the real result)
    hist_scr: (T, Hp)    VMEM scratch, hidden state per timestep
    """
    T = gin_ref.shape[0]
    Hp = whh_ref.shape[0]

    # Loop-invariant: keep the fused recurrent weights resident in vregs.
    whh = whh_ref[...]                                    # (Hp, 4*Hp)

    def step(t, carry):
        h, c = carry                                      # (1, Hp) each
        # One MXU pass per timestep: (1, Hp) @ (Hp, 4*Hp).
        pre = gin_ref[pl.ds(t, 1), :] + jnp.dot(
            h, whh, preferred_element_type=jnp.float32)   # (1, 4*Hp)

        # PyTorch gate order: input, forget, cell(g), output.
        i_g = jax.nn.sigmoid(pre[:, 0 * Hp:1 * Hp])
        f_g = jax.nn.sigmoid(pre[:, 1 * Hp:2 * Hp])
        g_g = jnp.tanh(pre[:, 2 * Hp:3 * Hp])
        o_g = jax.nn.sigmoid(pre[:, 3 * Hp:4 * Hp])

        c_new = f_g * c + i_g * g_g
        h_new = o_g * jnp.tanh(c_new)

        hist_scr[pl.ds(t, 1), :] = h_new
        return (h_new, c_new)

    h0 = jnp.zeros((1, Hp), jnp.float32)
    c0 = jnp.zeros((1, Hp), jnp.float32)
    # T is small & static here -> full unroll gives the scheduler cross-step
    # visibility.  TODO(synk): for long T, tile T with a grid + BlockSpecs
    # instead of keeping gin/hist fully resident (v7x VMEM budget).
    lax.fori_loop(0, T, step, (h0, c0), unroll=True)

    # Final Linear(50, 1) as a lane-dense padded matmul: (T, Hp) @ (Hp, 128).
    out_ref[...] = (jnp.dot(hist_scr[...], fcw_ref[...],
                            preferred_element_type=jnp.float32)
                    + fcb_ref[...])


def timeseries_lstm_forward(x, params):
    """x: (T, B, 1) float32. Returns (T, 1) float32 (matches PyTorch module)."""
    T, B, _ = x.shape
    H, Hp = HIDDEN, HPAD

    w_ih = params["weight_ih"]          # (4H, 1)
    w_hh = params["weight_hh"]          # (4H, H)
    b_ih = params["bias_ih"]            # (4H,)
    b_hh = params["bias_hh"]            # (4H,)
    fc_w = params["fc_weight"]          # (1, H)
    fc_b = params["fc_bias"]            # (1,)

    # out[:, -1, :] only uses the last batch element -> run recurrence on it.
    x_last = x[:, B - 1, 0].astype(jnp.float32)                     # (T,)

    # Hoisted input projection + biases, padded per gate 50 -> 64 lanes.
    gin = x_last[:, None] * w_ih[:, 0][None, :] + (b_ih + b_hh)[None, :]  # (T, 4H)
    gin = jnp.pad(gin.reshape(T, 4, H), ((0, 0), (0, 0), (0, Hp - H)))
    gin = gin.reshape(T, 4 * Hp).astype(jnp.float32)                # (T, 256)

    # Fused, per-gate-transposed recurrent weights: (Hp, 4*Hp) = (64, 256).
    whh_t = jnp.transpose(w_hh.reshape(4, H, H), (0, 2, 1))         # (4, H, H)
    whh_t = jnp.pad(whh_t, ((0, 0), (0, Hp - H), (0, Hp - H)))      # (4, Hp, Hp)
    whh_fused = jnp.transpose(whh_t, (1, 0, 2)).reshape(Hp, 4 * Hp)
    whh_fused = whh_fused.astype(jnp.float32)

    # FC weights/bias in a lane-dense (Hp, 128) slab; real output in lane 0.
    fcw = jnp.zeros((Hp, 128), jnp.float32).at[:H, 0].set(fc_w[0, :])
    fcb = jnp.zeros((1, 128), jnp.float32).at[0, 0].set(fc_b[0])

    vmem = pl.BlockSpec(memory_space=pltpu.MemorySpace.VMEM)
    out = pl.pallas_call(
        lstm_fc_kernel,
        out_shape=jax.ShapeDtypeStruct((T, 128), jnp.float32),
        in_specs=[vmem] * 4,
        out_specs=vmem,
        scratch_shapes=[
            pltpu.VMEM((T, Hp), jnp.float32),   # hidden-state history
        ],
    )(gin, whh_fused, fcw, fcb)
    return out[:, :1]                            # (T, 1)


def reference_forward(x, params):
    """Pure-JAX reference reproducing the PyTorch module exactly."""
    T, B, _ = x.shape
    H = HIDDEN
    w_ih, w_hh = params["weight_ih"], params["weight_hh"]
    b_ih, b_hh = params["bias_ih"], params["bias_hh"]
    fc_w, fc_b = params["fc_weight"], params["fc_bias"]

    def step(carry, x_t):
        h, c = carry
        gates = x_t @ w_ih.T + b_ih + h @ w_hh.T + b_hh
        i, f, g, o = jnp.split(gates, 4, axis=-1)
        i, f, o = jax.nn.sigmoid(i), jax.nn.sigmoid(f), jax.nn.sigmoid(o)
        g = jnp.tanh(g)
        c = f * c + i * g
        h = o * jnp.tanh(c)
        return (h, c), h

    h0 = jnp.zeros((B, H), jnp.float32)
    c0 = jnp.zeros((B, H), jnp.float32)
    _, hs = lax.scan(step, (h0, c0), x)          # hs: (T, B, H)
    sel = hs[:, -1, :]                           # (T, H)  == out[:, -1, :]
    return sel @ fc_w.T + fc_b                   # (T, 1)


def init_params(key):
    """Deterministic init mimicking PyTorch defaults (uniform(-k, k), k=1/sqrt(H))."""
    H = HIDDEN
    k_lstm = 1.0 / np.sqrt(H)
    k_fc = 1.0 / np.sqrt(H)
    ks = jax.random.split(key, 6)
    u = lambda kk, shape, k: jax.random.uniform(kk, shape, jnp.float32, -k, k)
    return {
        "weight_ih": u(ks[0], (4 * H, 1), k_lstm),
        "weight_hh": u(ks[1], (4 * H, H), k_lstm),
        "bias_ih":   u(ks[2], (4 * H,), k_lstm),
        "bias_hh":   u(ks[3], (4 * H,), k_lstm),
        "fc_weight": u(ks[4], (1, H), k_fc),
        "fc_bias":   u(ks[5], (1,), k_fc),
    }


if __name__ == "__main__":
    key = jax.random.PRNGKey(0)
    pkey, xkey = jax.random.split(key)
    params = init_params(pkey)

    T, B = 8, 4                       # small seq_len, batch
    x = jax.random.normal(xkey, (T, B, 1), jnp.float32)

    out = timeseries_lstm_forward(x, params)
    out = jax.block_until_ready(out)

    ref = jax.block_until_ready(reference_forward(x, params))
    assert out.shape == (T, 1)
    if not np.allclose(np.asarray(out), np.asarray(ref), atol=1e-4, rtol=1e-4):
        raise AssertionError("Pallas kernel output does not match JAX reference")

    print("KERNEL_OK")
</pallas_src>

<mosaic_0001>
module attributes {stable_mosaic.version = 11 : i64} {
  func.func @lstm_fc_kernel(%arg0: memref<8x256xf32, #tpu.memory_space<vmem>>, %arg1: memref<64x256xf32, #tpu.memory_space<vmem>>, %arg2: memref<64x128xf32, #tpu.memory_space<vmem>>, %arg3: memref<1x128xf32, #tpu.memory_space<vmem>>, %arg4: memref<8x128xf32, #tpu.memory_space<vmem>>, %arg5: memref<8x64xf32, #tpu.memory_space<vmem>>) attributes {dimension_semantics = [], scalar_prefetch = 0 : i64, scratch_operands = 1 : i64, tpu.core_type = #tpu.core_type<tc>} {
    %c0 = arith.constant 0 : index
    %c0_0 = arith.constant 0 : index
    %0 = vector.load %arg1[%c0, %c0_0] : memref<64x256xf32, #tpu.memory_space<vmem>>, vector<64x256xf32>
    %cst = arith.constant 0.000000e+00 : f32
    %1 = vector.broadcast %cst : f32 to vector<1x64xf32>
    %cst_1 = arith.constant 0.000000e+00 : f32
    %2 = vector.broadcast %cst_1 : f32 to vector<1x64xf32>
    %c0_i32 = arith.constant 0 : i32
    %3 = arith.index_cast %c0_i32 : i32 to index
    %c0_2 = arith.constant 0 : index
    %4 = vector.load %arg0[%3, %c0_2] : memref<8x256xf32, #tpu.memory_space<vmem>>, vector<1x256xf32>
    %cst_3 = arith.constant dense<0.000000e+00> : vector<1x256xf32>
    %5 = tpu.matmul %1, %0, %cst_3 {dimension_numbers = #tpu.dot_dimension_numbers<[1], [0], [0], [1], [0, 0, 1, 1], [], []>} : vector<1x64xf32>, vector<64x256xf32>, vector<1x256xf32> -> vector<1x256xf32>
    %6 = arith.addf %4, %5 : vector<1x256xf32>
    %7 = vector.extract_strided_slice %6 {offsets = [0, 0], sizes = [1, 64], strides = [1, 1]} : vector<1x256xf32> to vector<1x64xf32>
    %8 = arith.negf %7 : vector<1x64xf32>
    %9 = math.exp %8 : vector<1x64xf32>
    %cst_4 = arith.constant 1.000000e+00 : f32
    %10 = vector.broadcast %cst_4 : f32 to vector<1x64xf32>
    %11 = arith.addf %10, %9 : vector<1x64xf32>
    %12 = arith.divf %10, %11 : vector<1x64xf32>
    %13 = vector.extract_strided_slice %6 {offsets = [0, 64], sizes = [1, 64], strides = [1, 1]} : vector<1x256xf32> to vector<1x64xf32>
    %14 = arith.negf %13 : vector<1x64xf32>
    %15 = math.exp %14 : vector<1x64xf32>
    %cst_5 = arith.constant 1.000000e+00 : f32
    %16 = vector.broadcast %cst_5 : f32 to vector<1x64xf32>
    %17 = arith.addf %16, %15 : vector<1x64xf32>
    %18 = arith.divf %16, %17 : vector<1x64xf32>
    %19 = vector.extract_strided_slice %6 {offsets = [0, 128], sizes = [1, 64], strides = [1, 1]} : vector<1x256xf32> to vector<1x64xf32>
    %20 = math.tanh %19 : vector<1x64xf32>
    %21 = vector.extract_strided_slice %6 {offsets = [0, 192], sizes = [1, 64], strides = [1, 1]} : vector<1x256xf32> to vector<1x64xf32>
    %22 = arith.negf %21 : vector<1x64xf32>
    %23 = math.exp %22 : vector<1x64xf32>
    %cst_6 = arith.constant 1.000000e+00 : f32
    %24 = vector.broadcast %cst_6 : f32 to vector<1x64xf32>
    %25 = arith.addf %24, %23 : vector<1x64xf32>
    %26 = arith.divf %24, %25 : vector<1x64xf32>
    %27 = arith.mulf %18, %2 : vector<1x64xf32>
    %28 = arith.mulf %12, %20 : vector<1x64xf32>
    %29 = arith.addf %27, %28 : vector<1x64xf32>
    %30 = math.tanh %29 : vector<1x64xf32>
    %31 = arith.mulf %26, %30 : vector<1x64xf32>
    %32 = arith.index_cast %c0_i32 : i32 to index
    %c0_7 = arith.constant 0 : index
    %33 = vector.load %arg5[%32, %c0_7] : memref<8x64xf32, #tpu.memory_space<vmem>>, vector<1x64xf32>
    tpu.vector_store %arg5[%32, %c0_7], %31 {strides = array<i32>} : memref<8x64xf32, #tpu.memory_space<vmem>>, vector<1x64xf32>,
    %c1_i32 = arith.constant 1 : i32
    %34 = arith.index_cast %c1_i32 : i32 to index
    %c0_8 = arith.constant 0 : index
    %35 = vector.load %arg0[%34, %c0_8] : memref<8x256xf32, #tpu.memory_space<vmem>>, vector<1x256xf32>
    %cst_9 = arith.constant dense<0.000000e+00> : vector<1x256xf32>
    %36 = tpu.matmul %31, %0, %cst_9 {dimension_numbers = #tpu.dot_dimension_numbers<[1], [0], [0], [1], [0, 0, 1, 1], [], []>} : vector<1x64xf32>, vector<64x256xf32>, vector<1x256xf32> -> vector<1x256xf32>
    %37 = arith.addf %35, %36 : vector<1x256xf32>
    %38 = vector.extract_strided_slice %37 {offsets = [0, 0], sizes = [1, 64], strides = [1, 1]} : vector<1x256xf32> to vector<1x64xf32>
    %39 = arith.negf %38 : vector<1x64xf32>
    %40 = math.exp %39 : vector<1x64xf32>
    %cst_10 = arith.constant 1.000000e+00 : f32
    %41 = vector.broadcast %cst_10 : f32 to vector<1x64xf32>
    %42 = arith.addf %41, %40 : vector<1x64xf32>
    %43 = arith.divf %41, %42 : vector<1x64xf32>
    %44 = vector.extract_strided_slice %37 {offsets = [0, 64], sizes = [1, 64], strides = [1, 1]} : vector<1x256xf32> to vector<1x64xf32>
    %45 = arith.negf %44 : vector<1x64xf32>
    %46 = math.exp %45 : vector<1x64xf32>
    %cst_11 = arith.constant 1.000000e+00 : f32
    %47 = vector.broadcast %cst_11 : f32 to vector<1x64xf32>
    %48 = arith.addf %47, %46 : vector<1x64xf32>
    %49 = arith.divf %47, %48 : vector<1x64xf32>
    %50 = vector.extract_strided_slice %37 {offsets = [0, 128], sizes = [1, 64], strides = [1, 1]} : vector<1x256xf32> to vector<1x64xf32>
    %51 = math.tanh %50 : vector<1x64xf32>
    %52 = vector.extract_strided_slice %37 {offsets = [0, 192], sizes = [1, 64], strides = [1, 1]} : vector<1x256xf32> to vector<1x64xf32>
    %53 = arith.negf %52 : vector<1x64xf32>
    %54 = math.exp %53 : vector<1x64xf32>
    %cst_12 = arith.constant 1.000000e+00 : f32
    %55 = vector.broadcast %cst_12 : f32 to vector<1x64xf32>
    %56 = arith.addf %55, %54 : vector<1x64xf32>
    %57 = arith.divf %55, %56 : vector<1x64xf32>
    %58 = arith.mulf %49, %29 : vector<1x64xf32>
    %59 = arith.mulf %43, %51 : vector<1x64xf32>
    %60 = arith.addf %58, %59 : vector<1x64xf32>
    %61 = math.tanh %60 : vector<1x64xf32>
    %62 = arith.mulf %57, %61 : vector<1x64xf32>
    %63 = arith.index_cast %c1_i32 : i32 to index
    %c0_13 = arith.constant 0 : index
    %64 = vector.load %arg5[%63, %c0_13] : memref<8x64xf32, #tpu.memory_space<vmem>>, vector<1x64xf32>
    tpu.vector_store %arg5[%63, %c0_13], %62 {strides = array<i32>} : memref<8x64xf32, #tpu.memory_space<vmem>>, vector<1x64xf32>,
    %c2_i32 = arith.constant 2 : i32
    %65 = arith.index_cast %c2_i32 : i32 to index
    %c0_14 = arith.constant 0 : index
    %66 = vector.load %arg0[%65, %c0_14] : memref<8x256xf32, #tpu.memory_space<vmem>>, vector<1x256xf32>
    %cst_15 = arith.constant dense<0.000000e+00> : vector<1x256xf32>
    %67 = tpu.matmul %62, %0, %cst_15 {dimension_numbers = #tpu.dot_dimension_numbers<[1], [0], [0], [1], [0, 0, 1, 1], [], []>} : vector<1x64xf32>, vector<64x256xf32>, vector<1x256xf32> -> vector<1x256xf32>
    %68 = arith.addf %66, %67 : vector<1x256xf32>
    %69 = vector.extract_strided_slice %68 {offsets = [0, 0], sizes = [1, 64], strides = [1, 1]} : vector<1x256xf32> to vector<1x64xf32>
    %70 = arith.negf %69 : vector<1x64xf32>
    %71 = math.exp %70 : vector<1x64xf32>
    %cst_16 = arith.constant 1.000000e+00 : f32
    %72 = vector.broadcast %cst_16 : f32 to vector<1x64xf32>
    %73 = arith.addf %72, %71 : vector<1x64xf32>
    %74 = arith.divf %72, %73 : vector<1x64xf32>
    %75 = vector.extract_strided_slice %68 {offsets = [0, 64], sizes = [1, 64], strides = [1, 1]} : vector<1x256xf32> to vector<1x64xf32>
    %76 = arith.negf %75 : vector<1x64xf32>
    %77 = math.exp %76 : vector<1x64xf32>
    %cst_17 = arith.constant 1.000000e+00 : f32
    %78 = vector.broadcast %cst_17 : f32 to vector<1x64xf32>
    %79 = arith.addf %78, %77 : vector<1x64xf32>
    %80 = arith.divf %78, %79 : vector<1x64xf32>
    %81 = vector.extract_strided_slice %68 {offsets = [0, 128], sizes = [1, 64], strides = [1, 1]} : vector<1x256xf32> to vector<1x64xf32>
    %82 = math.tanh %81 : vector<1x64xf32>
    %83 = vector.extract_strided_slice %68 {offsets = [0, 192], sizes = [1, 64], strides = [1, 1]} : vector<1x256xf32> to vector<1x64xf32>
    %84 = arith.negf %83 : vector<1x64xf32>
    %85 = math.exp %84 : vector<1x64xf32>
    %cst_18 = arith.constant 1.000000e+00 : f32
    %86 = vector.broadcast %cst_18 : f32 to vector<1x64xf32>
    %87 = arith.addf %86, %85 : vector<1x64xf32>
    %88 = arith.divf %86, %87 : vector<1x64xf32>
    %89 = arith.mulf %80, %60 : vector<1x64xf32>
    %90 = arith.mulf %74, %82 : vector<1x64xf32>
    %91 = arith.addf %89, %90 : vector<1x64xf32>
    %92 = math.tanh %91 : vector<1x64xf32>
    %93 = arith.mulf %88, %92 : vector<1x64xf32>
    %94 = arith.index_cast %c2_i32 : i32 to index
    %c0_19 = arith.constant 0 : index
    %95 = vector.load %arg5[%94, %c0_19] : memref<8x64xf32, #tpu.memory_space<vmem>>, vector<1x64xf32>
    tpu.vector_store %arg5[%94, %c0_19], %93 {strides = array<i32>} : memref<8x64xf32, #tpu.memory_space<vmem>>, vector<1x64xf32>,
    %c3_i32 = arith.constant 3 : i32
    %96 = arith.index_cast %c3_i32 : i32 to index
    %c0_20 = arith.constant 0 : index
    %97 = vector.load %arg0[%96, %c0_20] : memref<8x256xf32, #tpu.memory_space<vmem>>, vector<1x256xf32>
    %cst_21 = arith.constant dense<0.000000e+00> : vector<1x256xf32>
    %98 = tpu.matmul %93, %0, %cst_21 {dimension_numbers = #tpu.dot_dimension_numbers<[1], [0], [0], [1], [0, 0, 1, 1], [], []>} : vector<1x64xf32>, vector<64x256xf32>, vector<1x256xf32> -> vector<1x256xf32>
    %99 = arith.addf %97, %98 : vector<1x256xf32>
    %100 = vector.extract_strided_slice %99 {offsets = [0, 0], sizes = [1, 64], strides = [1, 1]} : vector<1x256xf32> to vector<1x64xf32>
    %101 = arith.negf %100 : vector<1x64xf32>
    %102 = math.exp %101 : vector<1x64xf32>
    %cst_22 = arith.constant 1.000000e+00 : f32
    %103 = vector.broadcast %cst_22 : f32 to vector<1x64xf32>
    %104 = arith.addf %103, %102 : vector<1x64xf32>
    %105 = arith.divf %103, %104 : vector<1x64xf32>
    %106 = vector.extract_strided_slice %99 {offsets = [0, 64], sizes = [1, 64], strides = [1, 1]} : vector<1x256xf32> to vector<1x64xf32>
    %107 = arith.negf %106 : vector<1x64xf32>
    %108 = math.exp %107 : vector<1x64xf32>
    %cst_23 = arith.constant 1.000000e+00 : f32
    %109 = vector.broadcast %cst_23 : f32 to vector<1x64xf32>
    %110 = arith.addf %109, %108 : vector<1x64xf32>
    %111 = arith.divf %109, %110 : vector<1x64xf32>
    %112 = vector.extract_strided_slice %99 {offsets = [0, 128], sizes = [1, 64], strides = [1, 1]} : vector<1x256xf32> to vector<1x64xf32>
    %113 = math.tanh %112 : vector<1x64xf32>
    %114 = vector.extract_strided_slice %99 {offsets = [0, 192], sizes = [1, 64], strides = [1, 1]} : vector<1x256xf32> to vector<1x64xf32>
    %115 = arith.negf %114 : vector<1x64xf32>
    %116 = math.exp %115 : vector<1x64xf32>
    %cst_24 = arith.constant 1.000000e+00 : f32
    %117 = vector.broadcast %cst_24 : f32 to vector<1x64xf32>
    %118 = arith.addf %117, %116 : vector<1x64xf32>
    %119 = arith.divf %117, %118 : vector<1x64xf32>
    %120 = arith.mulf %111, %91 : vector<1x64xf32>
    %121 = arith.mulf %105, %113 : vector<1x64xf32>
    %122 = arith.addf %120, %121 : vector<1x64xf32>
    %123 = math.tanh %122 : vector<1x64xf32>
    %124 = arith.mulf %119, %123 : vector<1x64xf32>
    %125 = arith.index_cast %c3_i32 : i32 to index
    %c0_25 = arith.constant 0 : index
    %126 = vector.load %arg5[%125, %c0_25] : memref<8x64xf32, #tpu.memory_space<vmem>>, vector<1x64xf32>
    tpu.vector_store %arg5[%125, %c0_25], %124 {strides = array<i32>} : memref<8x64xf32, #tpu.memory_space<vmem>>, vector<1x64xf32>,
    %c4_i32 = arith.constant 4 : i32
    %127 = arith.index_cast %c4_i32 : i32 to index
    %c0_26 = arith.constant 0 : index
    %128 = vector.load %arg0[%127, %c0_26] : memref<8x256xf32, #tpu.memory_space<vmem>>, vector<1x256xf32>
    %cst_27 = arith.constant dense<0.000000e+00> : vector<1x256xf32>
    %129 = tpu.matmul %124, %0, %cst_27 {dimension_numbers = #tpu.dot_dimension_numbers<[1], [0], [0], [1], [0, 0, 1, 1], [], []>} : vector<1x64xf32>, vector<64x256xf32>, vector<1x256xf32> -> vector<1x256xf32>
    %130 = arith.addf %128, %129 : vector<1x256xf32>
    %131 = vector.extract_strided_slice %130 {offsets = [0, 0], sizes = [1, 64], strides = [1, 1]} : vector<1x256xf32> to vector<1x64xf32>
    %132 = arith.negf %131 : vector<1x64xf32>
    %133 = math.exp %132 : vector<1x64xf32>
    %cst_28 = arith.constant 1.000000e+00 : f32
    %134 = vector.broadcast %cst_28 : f32 to vector<1x64xf32>
    %135 = arith.addf %134, %133 : vector<1x64xf32>
    %136 = arith.divf %134, %135 : vector<1x64xf32>
    %137 = vector.extract_strided_slice %130 {offsets = [0, 64], sizes = [1, 64], strides = [1, 1]} : vector<1x256xf32> to vector<1x64xf32>
    %138 = arith.negf %137 : vector<1x64xf32>
    %139 = math.exp %138 : vector<1x64xf32>
    %cst_29 = arith.constant 1.000000e+00 : f32
    %140 = vector.broadcast %cst_29 : f32 to vector<1x64xf32>
    %141 = arith.addf %140, %139 : vector<1x64xf32>
    %142 = arith.divf %140, %141 : vector<1x64xf32>
    %143 = vector.extract_strided_slice %130 {offsets = [0, 128], sizes = [1, 64], strides = [1, 1]} : vector<1x256xf32> to vector<1x64xf32>
    %144 = math.tanh %143 : vector<1x64xf32>
    %145 = vector.extract_strided_slice %130 {offsets = [0, 192], sizes = [1, 64], strides = [1, 1]} : vector<1x256xf32> to vector<1x64xf32>
    %146 = arith.negf %145 : vector<1x64xf32>
    %147 = math.exp %146 : vector<1x64xf32>
    %cst_30 = arith.constant 1.000000e+00 : f32
    %148 = vector.broadcast %cst_30 : f32 to vector<1x64xf32>
    %149 = arith.addf %148, %147 : vector<1x64xf32>
    %150 = arith.divf %148, %149 : vector<1x64xf32>
    %151 = arith.mulf %142, %122 : vector<1x64xf32>
    %152 = arith.mulf %136, %144 : vector<1x64xf32>
    %153 = arith.addf %151, %152 : vector<1x64xf32>
    %154 = math.tanh %153 : vector<1x64xf32>
    %155 = arith.mulf %150, %154 : vector<1x64xf32>
    %156 = arith.index_cast %c4_i32 : i32 to index
    %c0_31 = arith.constant 0 : index
    %157 = vector.load %arg5[%156, %c0_31] : memref<8x64xf32, #tpu.memory_space<vmem>>, vector<1x64xf32>
    tpu.vector_store %arg5[%156, %c0_31], %155 {strides = array<i32>} : memref<8x64xf32, #tpu.memory_space<vmem>>, vector<1x64xf32>,
    %c5_i32 = arith.constant 5 : i32
    %158 = arith.index_cast %c5_i32 : i32 to index
    %c0_32 = arith.constant 0 : index
    %159 = vector.load %arg0[%158, %c0_32] : memref<8x256xf32, #tpu.memory_space<vmem>>, vector<1x256xf32>
    %cst_33 = arith.constant dense<0.000000e+00> : vector<1x256xf32>
    %160 = tpu.matmul %155, %0, %cst_33 {dimension_numbers = #tpu.dot_dimension_numbers<[1], [0], [0], [1], [0, 0, 1, 1], [], []>} : vector<1x64xf32>, vector<64x256xf32>, vector<1x256xf32> -> vector<1x256xf32>
    %161 = arith.addf %159, %160 : vector<1x256xf32>
    %162 = vector.extract_strided_slice %161 {offsets = [0, 0], sizes = [1, 64], strides = [1, 1]} : vector<1x256xf32> to vector<1x64xf32>
    %163 = arith.negf %162 : vector<1x64xf32>
    %164 = math.exp %163 : vector<1x64xf32>
    %cst_34 = arith.constant 1.000000e+00 : f32
    %165 = vector.broadcast %cst_34 : f32 to vector<1x64xf32>
    %166 = arith.addf %165, %164 : vector<1x64xf32>
    %167 = arith.divf %165, %166 : vector<1x64xf32>
    %168 = vector.extract_strided_slice %161 {offsets = [0, 64], sizes = [1, 64], strides = [1, 1]} : vector<1x256xf32> to vector<1x64xf32>
    %169 = arith.negf %168 : vector<1x64xf32>
    %170 = math.exp %169 : vector<1x64xf32>
    %cst_35 = arith.constant 1.000000e+00 : f32
    %171 = vector.broadcast %cst_35 : f32 to vector<1x64xf32>
    %172 = arith.addf %171, %170 : vector<1x64xf32>
    %173 = arith.divf %171, %172 : vector<1x64xf32>
    %174 = vector.extract_strided_slice %161 {offsets = [0, 128], sizes = [1, 64], strides = [1, 1]} : vector<1x256xf32> to vector<1x64xf32>
    %175 = math.tanh %174 : vector<1x64xf32>
    %176 = vector.extract_strided_slice %161 {offsets = [0, 192], sizes = [1, 64], strides = [1, 1]} : vector<1x256xf32> to vector<1x64xf32>
    %177 = arith.negf %176 : vector<1x64xf32>
    %178 = math.exp %177 : vector<1x64xf32>
    %cst_36 = arith.constant 1.000000e+00 : f32
    %179 = vector.broadcast %cst_36 : f32 to vector<1x64xf32>
    %180 = arith.addf %179, %178 : vector<1x64xf32>
    %181 = arith.divf %179, %180 : vector<1x64xf32>
    %182 = arith.mulf %173, %153 : vector<1x64xf32>
    %183 = arith.mulf %167, %175 : vector<1x64xf32>
    %184 = arith.addf %182, %183 : vector<1x64xf32>
    %185 = math.tanh %184 : vector<1x64xf32>
    %186 = arith.mulf %181, %185 : vector<1x64xf32>
    %187 = arith.index_cast %c5_i32 : i32 to index
    %c0_37 = arith.constant 0 : index
    %188 = vector.load %arg5[%187, %c0_37] : memref<8x64xf32, #tpu.memory_space<vmem>>, vector<1x64xf32>
    tpu.vector_store %arg5[%187, %c0_37], %186 {strides = array<i32>} : memref<8x64xf32, #tpu.memory_space<vmem>>, vector<1x64xf32>,
    %c6_i32 = arith.constant 6 : i32
    %189 = arith.index_cast %c6_i32 : i32 to index
    %c0_38 = arith.constant 0 : index
    %190 = vector.load %arg0[%189, %c0_38] : memref<8x256xf32, #tpu.memory_space<vmem>>, vector<1x256xf32>
    %cst_39 = arith.constant dense<0.000000e+00> : vector<1x256xf32>
    %191 = tpu.matmul %186, %0, %cst_39 {dimension_numbers = #tpu.dot_dimension_numbers<[1], [0], [0], [1], [0, 0, 1, 1], [], []>} : vector<1x64xf32>, vector<64x256xf32>, vector<1x256xf32> -> vector<1x256xf32>
    %192 = arith.addf %190, %191 : vector<1x256xf32>
    %193 = vector.extract_strided_slice %192 {offsets = [0, 0], sizes = [1, 64], strides = [1, 1]} : vector<1x256xf32> to vector<1x64xf32>
    %194 = arith.negf %193 : vector<1x64xf32>
    %195 = math.exp %194 : vector<1x64xf32>
    %cst_40 = arith.constant 1.000000e+00 : f32
    %196 = vector.broadcast %cst_40 : f32 to vector<1x64xf32>
    %197 = arith.addf %196, %195 : vector<1x64xf32>
    %198 = arith.divf %196, %197 : vector<1x64xf32>
    %199 = vector.extract_strided_slice %192 {offsets = [0, 64], sizes = [1, 64], strides = [1, 1]} : vector<1x256xf32> to vector<1x64xf32>
    %200 = arith.negf %199 : vector<1x64xf32>
    %201 = math.exp %200 : vector<1x64xf32>
    %cst_41 = arith.constant 1.000000e+00 : f32
    %202 = vector.broadcast %cst_41 : f32 to vector<1x64xf32>
    %203 = arith.addf %202, %201 : vector<1x64xf32>
    %204 = arith.divf %202, %203 : vector<1x64xf32>
    %205 = vector.extract_strided_slice %192 {offsets = [0, 128], sizes = [1, 64], strides = [1, 1]} : vector<1x256xf32> to vector<1x64xf32>
    %206 = math.tanh %205 : vector<1x64xf32>
    %207 = vector.extract_strided_slice %192 {offsets = [0, 192], sizes = [1, 64], strides = [1, 1]} : vector<1x256xf32> to vector<1x64xf32>
    %208 = arith.negf %207 : vector<1x64xf32>
    %209 = math.exp %208 : vector<1x64xf32>
    %cst_42 = arith.constant 1.000000e+00 : f32
    %210 = vector.broadcast %cst_42 : f32 to vector<1x64xf32>
    %211 = arith.addf %210, %209 : vector<1x64xf32>
    %212 = arith.divf %210, %211 : vector<1x64xf32>
    %213 = arith.mulf %204, %184 : vector<1x64xf32>
    %214 = arith.mulf %198, %206 : vector<1x64xf32>
    %215 = arith.addf %213, %214 : vector<1x64xf32>
    %216 = math.tanh %215 : vector<1x64xf32>
    %217 = arith.mulf %212, %216 : vector<1x64xf32>
    %218 = arith.index_cast %c6_i32 : i32 to index
    %c0_43 = arith.constant 0 : index
    %219 = vector.load %arg5[%218, %c0_43] : memref<8x64xf32, #tpu.memory_space<vmem>>, vector<1x64xf32>
    tpu.vector_store %arg5[%218, %c0_43], %217 {strides = array<i32>} : memref<8x64xf32, #tpu.memory_space<vmem>>, vector<1x64xf32>,
    %c7_i32 = arith.constant 7 : i32
    %220 = arith.index_cast %c7_i32 : i32 to index
    %c0_44 = arith.constant 0 : index
    %221 = vector.load %arg0[%220, %c0_44] : memref<8x256xf32, #tpu.memory_space<vmem>>, vector<1x256xf32>
    %cst_45 = arith.constant dense<0.000000e+00> : vector<1x256xf32>
    %222 = tpu.matmul %217, %0, %cst_45 {dimension_numbers = #tpu.dot_dimension_numbers<[1], [0], [0], [1], [0, 0, 1, 1], [], []>} : vector<1x64xf32>, vector<64x256xf32>, vector<1x256xf32> -> vector<1x256xf32>
    %223 = arith.addf %221, %222 : vector<1x256xf32>
    %224 = vector.extract_strided_slice %223 {offsets = [0, 0], sizes = [1, 64], strides = [1, 1]} : vector<1x256xf32> to vector<1x64xf32>
    %225 = arith.negf %224 : vector<1x64xf32>
    %226 = math.exp %225 : vector<1x64xf32>
    %cst_46 = arith.constant 1.000000e+00 : f32
    %227 = vector.broadcast %cst_46 : f32 to vector<1x64xf32>
    %228 = arith.addf %227, %226 : vector<1x64xf32>
    %229 = arith.divf %227, %228 : vector<1x64xf32>
    %230 = vector.extract_strided_slice %223 {offsets = [0, 64], sizes = [1, 64], strides = [1, 1]} : vector<1x256xf32> to vector<1x64xf32>
    %231 = arith.negf %230 : vector<1x64xf32>
    %232 = math.exp %231 : vector<1x64xf32>
    %cst_47 = arith.constant 1.000000e+00 : f32
    %233 = vector.broadcast %cst_47 : f32 to vector<1x64xf32>
    %234 = arith.addf %233, %232 : vector<1x64xf32>
    %235 = arith.divf %233, %234 : vector<1x64xf32>
    %236 = vector.extract_strided_slice %223 {offsets = [0, 128], sizes = [1, 64], strides = [1, 1]} : vector<1x256xf32> to vector<1x64xf32>
    %237 = math.tanh %236 : vector<1x64xf32>
    %238 = vector.extract_strided_slice %223 {offsets = [0, 192], sizes = [1, 64], strides = [1, 1]} : vector<1x256xf32> to vector<1x64xf32>
    %239 = arith.negf %238 : vector<1x64xf32>
    %240 = math.exp %239 : vector<1x64xf32>
    %cst_48 = arith.constant 1.000000e+00 : f32
    %241 = vector.broadcast %cst_48 : f32 to vector<1x64xf32>
    %242 = arith.addf %241, %240 : vector<1x64xf32>
    %243 = arith.divf %241, %242 : vector<1x64xf32>
    %244 = arith.mulf %235, %215 : vector<1x64xf32>
    %245 = arith.mulf %229, %237 : vector<1x64xf32>
    %246 = arith.addf %244, %245 : vector<1x64xf32>
    %247 = math.tanh %246 : vector<1x64xf32>
    %248 = arith.mulf %243, %247 : vector<1x64xf32>
    %249 = arith.index_cast %c7_i32 : i32 to index
    %c0_49 = arith.constant 0 : index
    %250 = vector.load %arg5[%249, %c0_49] : memref<8x64xf32, #tpu.memory_space<vmem>>, vector<1x64xf32>
    tpu.vector_store %arg5[%249, %c0_49], %248 {strides = array<i32>} : memref<8x64xf32, #tpu.memory_space<vmem>>, vector<1x64xf32>,
    %c8_i32 = arith.constant 8 : i32
    %c0_50 = arith.constant 0 : index
    %c0_51 = arith.constant 0 : index
    %251 = vector.load %arg5[%c0_50, %c0_51] : memref<8x64xf32, #tpu.memory_space<vmem>>, vector<8x64xf32>
    %c0_52 = arith.constant 0 : index
    %c0_53 = arith.constant 0 : index
    %252 = vector.load %arg2[%c0_52, %c0_53] : memref<64x128xf32, #tpu.memory_space<vmem>>, vector<64x128xf32>
    %cst_54 = arith.constant dense<0.000000e+00> : vector<8x128xf32>
    %253 = tpu.matmul %251, %252, %cst_54 {dimension_numbers = #tpu.dot_dimension_numbers<[1], [0], [0], [1], [0, 0, 1, 1], [], []>} : vector<8x64xf32>, vector<64x128xf32>, vector<8x128xf32> -> vector<8x128xf32>
    %c0_55 = arith.constant 0 : index
    %c0_56 = arith.constant 0 : index
    %254 = vector.load %arg3[%c0_55, %c0_56] : memref<1x128xf32, #tpu.memory_space<vmem>>, vector<1x128xf32>
    %255 = vector.broadcast %254 : vector<1x128xf32> to vector<8x128xf32>
    %256 = arith.addf %253, %255 : vector<8x128xf32>
    %c0_57 = arith.constant 0 : index
    %c0_58 = arith.constant 0 : index
    %257 = vector.load %arg4[%c0_57, %c0_58] : memref<8x128xf32, #tpu.memory_space<vmem>>, vector<8x128xf32>
    tpu.vector_store %arg4[%c0_57, %c0_58], %256 {strides = array<i32>} : memref<8x128xf32, #tpu.memory_space<vmem>>, vector<8x128xf32>,
    return
  }
}

</mosaic_0001>

<llo_original>
// kernel: tpu_custom_call.1
$region0: #{tpu_custom_call.1}
  #allocation0 [shape = 'u32[]', space=smem, size = 0x4, offset = 0x4, fixed_abs, tag = 'smem constant byte address 0x4 - core index']
  #allocation1 [shape = 'u32[144,128]{1,0:T(1,128)}', space=vmem, size = 0x12000, scoped, tag = 'internal scratch']
  #allocation2 [shape = 'f32[8,64]{1,0:T(8,128)}', space=vmem, size = 0x1000, scoped, tag = 'scratch operand']
  %s0 = inlined_call_operand.hbm [shape: f32[8,256], index: 0, kind: input, shape index: {}]
  %s1 = inlined_call_operand.hbm [shape: f32[64,256], index: 1, kind: input, shape index: {}]
  %s2 = inlined_call_operand.hbm [shape: f32[64,128], index: 2, kind: input, shape index: {}]
  %s3 = inlined_call_operand.vmem [shape: f32[1,128], index: 3, kind: input, shape index: {}]
  %s4 = inlined_call_operand.hbm [shape: f32[8,128], index: 4, kind: output, shape index: {}]
  %s5 = sld [smem:[#allocation0]]
  $region38: #{tpu_custom_call.1} parent=0
    _
  %s7 = ssub.s32 1, %s5
  %s8 = scalar_select 0, %s7, %s5
  $region1: #{tpu_custom_call.1} parent=0
    #allocation3 [shape = 'u8[8192]{0}', space=vmem, size = 0x2000, scoped, tag = 'input window, operand 0, single buffered']
    #allocation4 [shape = 's32[1]{0}', space=sflag, size = 0x4, scoped, tag = 'scoped memory for tpu_custom_call.1']
    #allocation5 [shape = 's32[1]{0}', space=sflag, size = 0x4, scoped, tag = 'scoped memory for tpu_custom_call.1']
    #allocation6 [shape = 'u8[65536]{0}', space=vmem, size = 0x10000, scoped, tag = 'input window, operand 1, single buffered']
    #allocation7 [shape = 's32[1]{0}', space=sflag, size = 0x4, scoped, tag = 'scoped memory for tpu_custom_call.1']
    #allocation8 [shape = 'u8[32768]{0}', space=vmem, size = 0x8000, scoped, tag = 'input window, operand 2, single buffered']
    #allocation9 [shape = 'u8[4096]{0}', space=vmem, size = 0x1000, scoped, tag = 'output window, operand 0, single buffered']
    %9 = vsyncpa [#allocation4], 0
    %10 = vsyncpa [#allocation7], 0
    %11 = vsyncpa [#allocation5], 0
    // Predicated region
    $region2: #{tpu_custom_call.1} parent=1 // pred_check
      _
    $region3: #{tpu_custom_call.1} parent=1 // pred_check_branch
      %13 = sbr.rel (0) target = $region5
    $region4: #{tpu_custom_call.1} parent=1 // pred_region
      %s15 = ssub.s32 256, 256
      %16 = vsyncadd [#allocation4], %s15
      %s18 = sshll.u32 [#allocation3], 4
      %s19 = int_to_ptr.vmem [resolvable:$true] %s18
      %21 = dma.hbm_to_vmem [thread:$0]  %s0, 256, %s19, [#allocation4]
    $region5: #{tpu_custom_call.1} parent=1 // pred_fallthru
      _
    // Predicated region
    $region6: #{tpu_custom_call.1} parent=1 // pred_check
      _
    $region7: #{tpu_custom_call.1} parent=1 // pred_check_branch
      %23 = sbr.rel (0) target = $region9
    $region8: #{tpu_custom_call.1} parent=1 // pred_region
      %s25 = ssub.s32 2048, 2048
      %26 = vsyncadd [#allocation7], %s25
      %s27 = sshll.u32 [#allocation6], 4
      %s28 = int_to_ptr.vmem [resolvable:$true] %s27
      %33 = dma.hbm_to_vmem [thread:$0]  %s1, 2048, %s28, [#allocation7], 256, 256, 16
    $region9: #{tpu_custom_call.1} parent=1 // pred_fallthru
      _
    // Predicated region
    $region10: #{tpu_custom_call.1} parent=1 // pred_check
      _
    $region11: #{tpu_custom_call.1} parent=1 // pred_check_branch
      %35 = sbr.rel (0) target = $region13
    $region12: #{tpu_custom_call.1} parent=1 // pred_region
      %s37 = ssub.s32 1024, 1024
      %38 = vsyncadd [#allocation7], %s37
      %s39 = sshll.u32 [#allocation8], 4
      %s40 = int_to_ptr.vmem [resolvable:$true] %s39
      %45 = dma.hbm_to_vmem [thread:$0]  %s2, 1024, %s40, [#allocation7], 128, 128, 8
    $region13: #{tpu_custom_call.1} parent=1 // pred_fallthru
      _
    // Predicated region
    $region14: #{tpu_custom_call.1} parent=1 // pred_check
      _
    $region15: #{tpu_custom_call.1} parent=1 // pred_check_branch
      %47 = sbr.rel (0) target = $region17
    $region16: #{tpu_custom_call.1} parent=1 // pred_region
      _
    $region17: #{tpu_custom_call.1} parent=1 // pred_fallthru
      _
    // Predicated region
    $region18: #{tpu_custom_call.1} parent=1 // pred_check
      _
    $region19: #{tpu_custom_call.1} parent=1 // pred_check_branch
      %49 = sbr.rel (0) target = $region21
    $region20: #{tpu_custom_call.1} parent=1 // pred_region
      %50 = dma.done [#allocation4], 256
    $region21: #{tpu_custom_call.1} parent=1 // pred_fallthru
      _
    // Predicated region
    $region22: #{tpu_custom_call.1} parent=1 // pred_check
      _
    $region23: #{tpu_custom_call.1} parent=1 // pred_check_branch
      %52 = sbr.rel (0) target = $region25
    $region24: #{tpu_custom_call.1} parent=1 // pred_region
      %53 = dma.done [#allocation7], 2048
    $region25: #{tpu_custom_call.1} parent=1 // pred_fallthru
      _
    // Predicated region
    $region26: #{tpu_custom_call.1} parent=1 // pred_check
      _
    $region27: #{tpu_custom_call.1} parent=1 // pred_check_branch
      %55 = sbr.rel (0) target = $region29
    $region28: #{tpu_custom_call.1} parent=1 // pred_region
      %56 = dma.done [#allocation7], 1024
    $region29: #{tpu_custom_call.1} parent=1 // pred_fallthru
      _
    %v57 = vld [vmem:[#allocation6] sm:$0xff]
    %v58 = vld [vmem:[#allocation6 + $0x8] sm:$0xff]
    %v59 = vld [vmem:[#allocation6 + $0x10] sm:$0xff]
    %v60 = vld [vmem:[#allocation6 + $0x18] sm:$0xff]
    %v61 = vld [vmem:[#allocation6 + $0x20] sm:$0xff]
    %v62 = vld [vmem:[#allocation6 + $0x28] sm:$0xff]
    %v63 = vld [vmem:[#allocation6 + $0x30] sm:$0xff]
    %v64 = vld [vmem:[#allocation6 + $0x38] sm:$0xff]
    %v65 = vld [vmem:[#allocation6 + $0x40] sm:$0xff]
    %v66 = vld [vmem:[#allocation6 + $0x48] sm:$0xff]
    %v67 = vld [vmem:[#allocation6 + $0x50] sm:$0xff]
    %v68 = vld [vmem:[#allocation6 + $0x58] sm:$0xff]
    %v69 = vld [vmem:[#allocation6 + $0x60] sm:$0xff]
    %v70 = vld [vmem:[#allocation6 + $0x68] sm:$0xff]
    %v71 = vld [vmem:[#allocation6 + $0x70] sm:$0xff]
    %v72 = vld [vmem:[#allocation6 + $0x78] sm:$0xff]
    %v73 = vld [vmem:[#allocation3] ss:$8 sm:$0x3]
    %vm74 = vcmask 523264
    %v76 = vsel %vm74, 0.0, 0
    %78 = vmatprep.subr.mxu0 %v58
    %79 = vmatpush1.msra.mxu0 %v57
    %80 = vmatprep.subr.mxu0 %v60
    %81 = vmatpush1.msra.mxu0 %v59
    %82 = vmatprep.subr.mxu0 %v62
    %83 = vmatpush1.msra.mxu0 %v61
    %84 = vmatprep.subr.mxu0 %v64
    %85 = vmatpush1.msra.mxu0 %v63
    %86 = vmatprep.subr.mxu0 %v66
    %87 = vmatpush1.msra.mxu0 %v65
    %88 = vmatprep.subr.mxu0 %v68
    %89 = vmatpush1.msra.mxu0 %v67
    %90 = vmatprep.subr.mxu0 %v70
    %91 = vmatpush1.msra.mxu0 %v69
    %92 = vmatprep.subr.mxu0 %v72
    %93 = vmatpush1.msra.mxu0 %v71
    %94 = vmatprep.subr.mxu0 0.0
    %95 = vmatpush1.msra.mxu0 0.0
    %96 = vmatprep.subr.mxu0 0.0
    %97 = vmatpush1.msra.mxu0 0.0
    %98 = vmatprep.subr.mxu0 0.0
    %99 = vmatpush1.msra.mxu0 0.0
    %100 = vmatprep.subr.mxu0 0.0
    %101 = vmatpush1.msra.mxu0 0.0
    %102 = vmatprep.subr.mxu0 0.0
    %103 = vmatpush1.msra.mxu0 0.0
    %104 = vmatprep.subr.mxu0 0.0
    %105 = vmatpush1.msra.mxu0 0.0
    %106 = vmatprep.subr.mxu0 0.0
    %107 = vmatpush1.msra.mxu0 0.0
    %108 = vmatprep.subr.mxu0 0.0
    %109 = vmatpush1.msra.mxu0 0.0
    %110 = vmatprep.subr.mxu0 0.0
    %111 = vmatpush1.msra.mxu0 0.0
    %112 = vmatprep.subr.mxu0 0.0
    %113 = vmatpush1.msra.mxu0 0.0
    %114 = vmatprep.subr.mxu0 0.0
    %115 = vmatpush1.msra.mxu0 0.0
    %116 = vmatprep.subr.mxu0 0.0
    %117 = vmatpush1.msra.mxu0 0.0
    %118 = vmatprep.subr.mxu0 0.0
    %119 = vmatpush1.msra.mxu0 0.0
    %120 = vmatprep.subr.mxu0 0.0
    %121 = vmatpush1.msra.mxu0 0.0
    %122 = vmatprep.subr.mxu0 0.0
    %123 = vmatpush1.msra.mxu0 0.0
    %124 = vmatprep.subr.mxu0 0.0
    %125 = vmatpush1.msra.mxu0 0.0
    %126 = vmatprep.subr.mxu0 0.0
    %127 = vmatpush1.msra.mxu0 0.0
    %128 = vmatprep.subr.mxu0 0.0
    %129 = vmatpush1.msra.mxu0 0.0
    %130 = vmatprep.subr.mxu0 0.0
    %131 = vmatpush1.msra.mxu0 0.0
    %132 = vmatprep.subr.mxu0 0.0
    %133 = vmatpush1.msra.mxu0 0.0
    %134 = vmatprep.subr.mxu0 0.0
    %135 = vmatpush1.msra.mxu0 0.0
    %136 = vmatprep.subr.mxu0 0.0
    %137 = vmatpush1.msra.mxu0 0.0
    %138 = vmatprep.subr.mxu0 0.0
    %139 = vmatpush1.msra.mxu0 0.0
    %140 = vmatprep.subr.mxu0 0.0
    %141 = vmatpush1.msra.mxu0 0.0
    %142 = vmatprep.mubr.f32.mxu0 0.0
    %143 = vmatmul.mubr.f32.gmra.mrb[0].mxu0 %v76
    %v144 = vpop.f32.mrb[0].mxu0
    %v145 = vadd.f32 0.0, %v144
    %v146 = vpop.f32.mrb[0].mxu0
    %v147 = vadd.f32 0.0, %v146
    %148 = vdwg.mxu0
    %v151 = vcombine.low %v145, %v147
    %v153 = vunpack.c.l.s4 1966171168
    %v154 = vunpack.c.0.s8 %v153
    %v155 = vlaneseq
    %v156 = vshrl.u32 %v155, 7
    %v157 = vsub.s32 %v154, %v156
    %v158 = vrot.slane %v151, %v157
    %v160 = vunpack.c.l.s4 1966171168
    %v161 = vunpack.c.0.s8 %v160
    %v162 = vlaneseq
    %v163 = vshrl.u32 %v162, 7
    %v164 = vsub.s32 %v161, %v163
    %v165 = vrot.slane %v158, %v164
    %v167 = vadd.f32 %v73, %v165
    %v168 = vxor.u32 %v167, 2147483648
    %v169 = vmul.f32 %v168, 1.442695
    %v170 = vpow.pop %v169
    %v171 = vadd.f32 %v170, 1.0
    %v172 = vrcp.pop %v171
    %v173 = vmul.f32 1.0, %v172
    %v175 = vrot.slane %v167, 1
    %v177 = vtanh.pop %v175
    %178 = vrot.lane.b32.xlu0 %v167, 64
    %v179 = vpop.permute.xlu0 %178
    %v180 = vrot.slane %v179, 1
    %v182 = vxor.u32 %v180, 2147483648
    %v183 = vmul.f32 %v182, 1.442695
    %v184 = vpow.pop %v183
    %v185 = vadd.f32 %v184, 1.0
    %v186 = vrcp.pop %v185
    %v187 = vmul.f32 1.0, %v186
    %v188 = vmul.f32 %v173, 0.0
    %v189 = vmul.f32 %v173, %v177
    %191 = vrot.lane.b32.xlu0 %v189, 64
    %v192 = vpop.permute.xlu0 %191
    %v194 = vadd.f32 %v188, %v192
    %v195 = vtanh.pop %v194
    %197 = vrot.lane.b32.xlu0 %v195, 64
    %v198 = vpop.permute.xlu0 %197
    %v200 = vmul.f32 %v187, %v198
    %vm201 = vcmask 516096
    %202 = vst.msk [vmem:[#allocation2] sm:$0x1] %vm201, %v200
    %s203 = scalar_lea.vmem [#allocation3], 1
    %v204 = vld [vmem:[%s203] ss:$8 sm:$0x3]
    %v206 = vsel %vm74, %v200, 0
    %208 = vmatprep.subr.mxu0 %v58
    %209 = vmatpush1.msra.mxu0 %v57
    %210 = vmatprep.subr.mxu0 %v60
    %211 = vmatpush1.msra.mxu0 %v59
    %212 = vmatprep.subr.mxu0 %v62
    %213 = vmatpush1.msra.mxu0 %v61
    %214 = vmatprep.subr.mxu0 %v64
    %215 = vmatpush1.msra.mxu0 %v63
    %216 = vmatprep.subr.mxu0 %v66
    %217 = vmatpush1.msra.mxu0 %v65
    %218 = vmatprep.subr.mxu0 %v68
    %219 = vmatpush1.msra.mxu0 %v67
    %220 = vmatprep.subr.mxu0 %v70
    %221 = vmatpush1.msra.mxu0 %v69
    %222 = vmatprep.subr.mxu0 %v72
    %223 = vmatpush1.msra.mxu0 %v71
    %224 = vmatprep.subr.mxu0 0.0
    %225 = vmatpush1.msra.mxu0 0.0
    %226 = vmatprep.subr.mxu0 0.0
    %227 = vmatpush1.msra.mxu0 0.0
    %228 = vmatprep.subr.mxu0 0.0
    %229 = vmatpush1.msra.mxu0 0.0
    %230 = vmatprep.subr.mxu0 0.0
    %231 = vmatpush1.msra.mxu0 0.0
    %232 = vmatprep.subr.mxu0 0.0
    %233 = vmatpush1.msra.mxu0 0.0
    %234 = vmatprep.subr.mxu0 0.0
    %235 = vmatpush1.msra.mxu0 0.0
    %236 = vmatprep.subr.mxu0 0.0
    %237 = vmatpush1.msra.mxu0 0.0
    %238 = vmatprep.subr.mxu0 0.0
    %239 = vmatpush1.msra.mxu0 0.0
    %240 = vmatprep.subr.mxu0 0.0
    %241 = vmatpush1.msra.mxu0 0.0
    %242 = vmatprep.subr.mxu0 0.0
    %243 = vmatpush1.msra.mxu0 0.0
    %244 = vmatprep.subr.mxu0 0.0
    %245 = vmatpush1.msra.mxu0 0.0
    %246 = vmatprep.subr.mxu0 0.0
    %247 = vmatpush1.msra.mxu0 0.0
    %248 = vmatprep.subr.mxu0 0.0
    %249 = vmatpush1.msra.mxu0 0.0
    %250 = vmatprep.subr.mxu0 0.0
    %251 = vmatpush1.msra.mxu0 0.0
    %252 = vmatprep.subr.mxu0 0.0
    %253 = vmatpush1.msra.mxu0 0.0
    %254 = vmatprep.subr.mxu0 0.0
    %255 = vmatpush1.msra.mxu0 0.0
    %256 = vmatprep.subr.mxu0 0.0
    %257 = vmatpush1.msra.mxu0 0.0
    %258 = vmatprep.subr.mxu0 0.0
    %259 = vmatpush1.msra.mxu0 0.0
    %260 = vmatprep.subr.mxu0 0.0
    %261 = vmatpush1.msra.mxu0 0.0
    %262 = vmatprep.subr.mxu0 0.0
    %263 = vmatpush1.msra.mxu0 0.0
    %264 = vmatprep.subr.mxu0 0.0
    %265 = vmatpush1.msra.mxu0 0.0
    %266 = vmatprep.subr.mxu0 0.0
    %267 = vmatpush1.msra.mxu0 0.0
    %268 = vmatprep.subr.mxu0 0.0
    %269 = vmatpush1.msra.mxu0 0.0
    %270 = vmatprep.subr.mxu0 0.0
    %271 = vmatpush1.msra.mxu0 0.0
    %272 = vmatprep.mubr.f32.mxu0 0.0
    %273 = vmatmul.mubr.f32.gmra.mrb[0].mxu0 %v206
    %v274 = vpop.f32.mrb[0].mxu0
    %v275 = vadd.f32 0.0, %v274
    %v276 = vpop.f32.mrb[0].mxu0
    %v277 = vadd.f32 0.0, %v276
    %278 = vdwg.mxu0
    %v281 = vcombine.low %v275, %v277
    %v283 = vunpack.c.l.s4 1966171168
    %v284 = vunpack.c.0.s8 %v283
    %v285 = vlaneseq
    %v286 = vshrl.u32 %v285, 7
    %v287 = vsub.s32 %v284, %v286
    %v288 = vrot.slane %v281, %v287
    %v290 = vunpack.c.l.s4 1966171168
    %v291 = vunpack.c.0.s8 %v290
    %v292 = vlaneseq
    %v293 = vshrl.u32 %v292, 7
    %v294 = vsub.s32 %v291, %v293
    %v295 = vrot.slane %v288, %v294
    %v297 = vadd.f32 %v204, %v295
    %v298 = vxor.u32 %v297, 2147483648
    %v299 = vmul.f32 %v298, 1.442695
    %v300 = vpow.pop %v299
    %v301 = vadd.f32 %v300, 1.0
    %v302 = vrcp.pop %v301
    %v303 = vmul.f32 1.0, %v302
    %v305 = vrot.slane %v297, 1
    %v307 = vtanh.pop %v305
    %308 = vrot.lane.b32.xlu0 %v297, 64
    %v309 = vpop.permute.xlu0 %308
    %v310 = vrot.slane %v309, 1
    %v312 = vxor.u32 %v310, 2147483648
    %v313 = vmul.f32 %v312, 1.442695
    %v314 = vpow.pop %v313
    %v315 = vadd.f32 %v314, 1.0
    %v316 = vrcp.pop %v315
    %v317 = vmul.f32 1.0, %v316
    %v318 = vmul.f32 %v303, %v194
    %v319 = vmul.f32 %v303, %v307
    %321 = vrot.lane.b32.xlu0 %v319, 64
    %v322 = vpop.permute.xlu0 %321
    %v324 = vadd.f32 %v318, %v322
    %v325 = vtanh.pop %v324
    %327 = vrot.lane.b32.xlu0 %v325, 64
    %v328 = vpop.permute.xlu0 %327
    %v330 = vmul.f32 %v317, %v328
    %331 = vst.msk [vmem:[#allocation2 + $0x1] sm:$0x1] %vm201, %v330
    %s332 = scalar_lea.vmem [#allocation3], 2
    %v333 = vld [vmem:[%s332] ss:$8 sm:$0x3]
    %v335 = vsel %vm74, %v330, 0
    %337 = vmatprep.subr.mxu0 %v58
    %338 = vmatpush1.msra.mxu0 %v57
    %339 = vmatprep.subr.mxu0 %v60
    %340 = vmatpush1.msra.mxu0 %v59
    %341 = vmatprep.subr.mxu0 %v62
    %342 = vmatpush1.msra.mxu0 %v61
    %343 = vmatprep.subr.mxu0 %v64
    %344 = vmatpush1.msra.mxu0 %v63
    %345 = vmatprep.subr.mxu0 %v66
    %346 = vmatpush1.msra.mxu0 %v65
    %347 = vmatprep.subr.mxu0 %v68
    %348 = vmatpush1.msra.mxu0 %v67
    %349 = vmatprep.subr.mxu0 %v70
    %350 = vmatpush1.msra.mxu0 %v69
    %351 = vmatprep.subr.mxu0 %v72
    %352 = vmatpush1.msra.mxu0 %v71
    %353 = vmatprep.subr.mxu0 0.0
    %354 = vmatpush1.msra.mxu0 0.0
    %355 = vmatprep.subr.mxu0 0.0
    %356 = vmatpush1.msra.mxu0 0.0
    %357 = vmatprep.subr.mxu0 0.0
    %358 = vmatpush1.msra.mxu0 0.0
    %359 = vmatprep.subr.mxu0 0.0
    %360 = vmatpush1.msra.mxu0 0.0
    %361 = vmatprep.subr.mxu0 0.0
    %362 = vmatpush1.msra.mxu0 0.0
    %363 = vmatprep.subr.mxu0 0.0
    %364 = vmatpush1.msra.mxu0 0.0
    %365 = vmatprep.subr.mxu0 0.0
    %366 = vmatpush1.msra.mxu0 0.0
    %367 = vmatprep.subr.mxu0 0.0
    %368 = vmatpush1.msra.mxu0 0.0
    %369 = vmatprep.subr.mxu0 0.0
    %370 = vmatpush1.msra.mxu0 0.0
    %371 = vmatprep.subr.mxu0 0.0
    %372 = vmatpush1.msra.mxu0 0.0
    %373 = vmatprep.subr.mxu0 0.0
    %374 = vmatpush1.msra.mxu0 0.0
    %375 = vmatprep.subr.mxu0 0.0
    %376 = vmatpush1.msra.mxu0 0.0
    %377 = vmatprep.subr.mxu0 0.0
    %378 = vmatpush1.msra.mxu0 0.0
    %379 = vmatprep.subr.mxu0 0.0
    %380 = vmatpush1.msra.mxu0 0.0
    %381 = vmatprep.subr.mxu0 0.0
    %382 = vmatpush1.msra.mxu0 0.0
    %383 = vmatprep.subr.mxu0 0.0
    %384 = vmatpush1.msra.mxu0 0.0
    %385 = vmatprep.subr.mxu0 0.0
    %386 = vmatpush1.msra.mxu0 0.0
    %387 = vmatprep.subr.mxu0 0.0
    %388 = vmatpush1.msra.mxu0 0.0
    %389 = vmatprep.subr.mxu0 0.0
    %390 = vmatpush1.msra.mxu0 0.0
    %391 = vmatprep.subr.mxu0 0.0
    %392 = vmatpush1.msra.mxu0 0.0
    %393 = vmatprep.subr.mxu0 0.0
    %394 = vmatpush1.msra.mxu0 0.0
    %395 = vmatprep.subr.mxu0 0.0
    %396 = vmatpush1.msra.mxu0 0.0
    %397 = vmatprep.subr.mxu0 0.0
    %398 = vmatpush1.msra.mxu0 0.0
    %399 = vmatprep.subr.mxu0 0.0
    %400 = vmatpush1.msra.mxu0 0.0
    %401 = vmatprep.mubr.f32.mxu0 0.0
    %402 = vmatmul.mubr.f32.gmra.mrb[0].mxu0 %v335
    %v403 = vpop.f32.mrb[0].mxu0
    %v404 = vadd.f32 0.0, %v403
    %v405 = vpop.f32.mrb[0].mxu0
    %v406 = vadd.f32 0.0, %v405
    %407 = vdwg.mxu0
    %v410 = vcombine.low %v404, %v406
    %v412 = vunpack.c.l.s4 1966171168
    %v413 = vunpack.c.0.s8 %v412
    %v414 = vlaneseq
    %v415 = vshrl.u32 %v414, 7
    %v416 = vsub.s32 %v413, %v415
    %v417 = vrot.slane %v410, %v416
    %v419 = vunpack.c.l.s4 1966171168
    %v420 = vunpack.c.0.s8 %v419
    %v421 = vlaneseq
    %v422 = vshrl.u32 %v421, 7
    %v423 = vsub.s32 %v420, %v422
    %v424 = vrot.slane %v417, %v423
    %v426 = vadd.f32 %v333, %v424
    %v427 = vxor.u32 %v426, 2147483648
    %v428 = vmul.f32 %v427, 1.442695
    %v429 = vpow.pop %v428
    %v430 = vadd.f32 %v429, 1.0
    %v431 = vrcp.pop %v430
    %v432 = vmul.f32 1.0, %v431
    %v434 = vrot.slane %v426, 1
    %v436 = vtanh.pop %v434
    %437 = vrot.lane.b32.xlu0 %v426, 64
    %v438 = vpop.permute.xlu0 %437
    %v439 = vrot.slane %v438, 1
    %v441 = vxor.u32 %v439, 2147483648
    %v442 = vmul.f32 %v441, 1.442695
    %v443 = vpow.pop %v442
    %v444 = vadd.f32 %v443, 1.0
    %v445 = vrcp.pop %v444
    %v446 = vmul.f32 1.0, %v445
    %v447 = vmul.f32 %v432, %v324
    %v448 = vmul.f32 %v432, %v436
    %450 = vrot.lane.b32.xlu0 %v448, 64
    %v451 = vpop.permute.xlu0 %450
    %v453 = vadd.f32 %v447, %v451
    %v454 = vtanh.pop %v453
    %456 = vrot.lane.b32.xlu0 %v454, 64
    %v457 = vpop.permute.xlu0 %456
    %v459 = vmul.f32 %v446, %v457
    %460 = vst.msk [vmem:[#allocation2 + $0x2] sm:$0x1] %vm201, %v459
    %s461 = scalar_lea.vmem [#allocation3], 3
    %v462 = vld [vmem:[%s461] ss:$8 sm:$0x3]
    %v464 = vsel %vm74, %v459, 0
    %466 = vmatprep.subr.mxu0 %v58
    %467 = vmatpush1.msra.mxu0 %v57
    %468 = vmatprep.subr.mxu0 %v60
    %469 = vmatpush1.msra.mxu0 %v59
    %470 = vmatprep.subr.mxu0 %v62
    %471 = vmatpush1.msra.mxu0 %v61
    %472 = vmatprep.subr.mxu0 %v64
    %473 = vmatpush1.msra.mxu0 %v63
    %474 = vmatprep.subr.mxu0 %v66
    %475 = vmatpush1.msra.mxu0 %v65
    %476 = vmatprep.subr.mxu0 %v68
    %477 = vmatpush1.msra.mxu0 %v67
    %478 = vmatprep.subr.mxu0 %v70
    %479 = vmatpush1.msra.mxu0 %v69
    %480 = vmatprep.subr.mxu0 %v72
    %481 = vmatpush1.msra.mxu0 %v71
    %482 = vmatprep.subr.mxu0 0.0
    %483 = vmatpush1.msra.mxu0 0.0
    %484 = vmatprep.subr.mxu0 0.0
    %485 = vmatpush1.msra.mxu0 0.0
    %486 = vmatprep.subr.mxu0 0.0
    %487 = vmatpush1.msra.mxu0 0.0
    %488 = vmatprep.subr.mxu0 0.0
    %489 = vmatpush1.msra.mxu0 0.0
    %490 = vmatprep.subr.mxu0 0.0
    %491 = vmatpush1.msra.mxu0 0.0
    %492 = vmatprep.subr.mxu0 0.0
    %493 = vmatpush1.msra.mxu0 0.0
    %494 = vmatprep.subr.mxu0 0.0
    %495 = vmatpush1.msra.mxu0 0.0
    %496 = vmatprep.subr.mxu0 0.0
    %497 = vmatpush1.msra.mxu0 0.0
    %498 = vmatprep.subr.mxu0 0.0
    %499 = vmatpush1.msra.mxu0 0.0
    %500 = vmatprep.subr.mxu0 0.0
    %501 = vmatpush1.msra.mxu0 0.0
    %502 = vmatprep.subr.mxu0 0.0
    %503 = vmatpush1.msra.mxu0 0.0
    %504 = vmatprep.subr.mxu0 0.0
    %505 = vmatpush1.msra.mxu0 0.0
    %506 = vmatprep.subr.mxu0 0.0
    %507 = vmatpush1.msra.mxu0 0.0
    %508 = vmatprep.subr.mxu0 0.0
    %509 = vmatpush1.msra.mxu0 0.0
    %510 = vmatprep.subr.mxu0 0.0
    %511 = vmatpush1.msra.mxu0 0.0
    %512 = vmatprep.subr.mxu0 0.0
    %513 = vmatpush1.msra.mxu0 0.0
    %514 = vmatprep.subr.mxu0 0.0
    %515 = vmatpush1.msra.mxu0 0.0
    %516 = vmatprep.subr.mxu0 0.0
    %517 = vmatpush1.msra.mxu0 0.0
    %518 = vmatprep.subr.mxu0 0.0
    %519 = vmatpush1.msra.mxu0 0.0
    %520 = vmatprep.subr.mxu0 0.0
    %521 = vmatpush1.msra.mxu0 0.0
    %522 = vmatprep.subr.mxu0 0.0
    %523 = vmatpush1.msra.mxu0 0.0
    %524 = vmatprep.subr.mxu0 0.0
    %525 = vmatpush1.msra.mxu0 0.0
    %526 = vmatprep.subr.mxu0 0.0
    %527 = vmatpush1.msra.mxu0 0.0
    %528 = vmatprep.subr.mxu0 0.0
    %529 = vmatpush1.msra.mxu0 0.0
    %530 = vmatprep.mubr.f32.mxu0 0.0
    %531 = vmatmul.mubr.f32.gmra.mrb[0].mxu0 %v464
    %v532 = vpop.f32.mrb[0].mxu0
    %v533 = vadd.f32 0.0, %v532
    %v534 = vpop.f32.mrb[0].mxu0
    %v535 = vadd.f32 0.0, %v534
    %536 = vdwg.mxu0
    %v539 = vcombine.low %v533, %v535
    %v541 = vunpack.c.l.s4 1966171168
    %v542 = vunpack.c.0.s8 %v541
    %v543 = vlaneseq
    %v544 = vshrl.u32 %v543, 7
    %v545 = vsub.s32 %v542, %v544
    %v546 = vrot.slane %v539, %v545
    %v548 = vunpack.c.l.s4 1966171168
    %v549 = vunpack.c.0.s8 %v548
    %v550 = vlaneseq
    %v551 = vshrl.u32 %v550, 7
    %v552 = vsub.s32 %v549, %v551
    %v553 = vrot.slane %v546, %v552
    %v555 = vadd.f32 %v462, %v553
    %v556 = vxor.u32 %v555, 2147483648
    %v557 = vmul.f32 %v556, 1.442695
    %v558 = vpow.pop %v557
    %v559 = vadd.f32 %v558, 1.0
    %v560 = vrcp.pop %v559
    %v561 = vmul.f32 1.0, %v560
    %v563 = vrot.slane %v555, 1
    %v565 = vtanh.pop %v563
    %566 = vrot.lane.b32.xlu0 %v555, 64
    %v567 = vpop.permute.xlu0 %566
    %v568 = vrot.slane %v567, 1
    %v570 = vxor.u32 %v568, 2147483648
    %v571 = vmul.f32 %v570, 1.442695
    %v572 = vpow.pop %v571
    %v573 = vadd.f32 %v572, 1.0
    %v574 = vrcp.pop %v573
    %v575 = vmul.f32 1.0, %v574
    %v576 = vmul.f32 %v561, %v453
    %v577 = vmul.f32 %v561, %v565
    %579 = vrot.lane.b32.xlu0 %v577, 64
    %v580 = vpop.permute.xlu0 %579
    %v582 = vadd.f32 %v576, %v580
    %v583 = vtanh.pop %v582
    %585 = vrot.lane.b32.xlu0 %v583, 64
    %v586 = vpop.permute.xlu0 %585
    %v588 = vmul.f32 %v575, %v586
    %589 = vst.msk [vmem:[#allocation2 + $0x3] sm:$0x1] %vm201, %v588
    %s590 = scalar_lea.vmem [#allocation3], 4
    %v591 = vld [vmem:[%s590] ss:$8 sm:$0x3]
    %v593 = vsel %vm74, %v588, 0
    %595 = vmatprep.subr.mxu0 %v58
    %596 = vmatpush1.msra.mxu0 %v57
    %597 = vmatprep.subr.mxu0 %v60
    %598 = vmatpush1.msra.mxu0 %v59
    %599 = vmatprep.subr.mxu0 %v62
    %600 = vmatpush1.msra.mxu0 %v61
    %601 = vmatprep.subr.mxu0 %v64
    %602 = vmatpush1.msra.mxu0 %v63
    %603 = vmatprep.subr.mxu0 %v66
    %604 = vmatpush1.msra.mxu0 %v65
    %605 = vmatprep.subr.mxu0 %v68
    %606 = vmatpush1.msra.mxu0 %v67
    %607 = vmatprep.subr.mxu0 %v70
    %608 = vmatpush1.msra.mxu0 %v69
    %609 = vmatprep.subr.mxu0 %v72
    %610 = vmatpush1.msra.mxu0 %v71
    %611 = vmatprep.subr.mxu0 0.0
    %612 = vmatpush1.msra.mxu0 0.0
    %613 = vmatprep.subr.mxu0 0.0
    %614 = vmatpush1.msra.mxu0 0.0
    %615 = vmatprep.subr.mxu0 0.0
    %616 = vmatpush1.msra.mxu0 0.0
    %617 = vmatprep.subr.mxu0 0.0
    %618 = vmatpush1.msra.mxu0 0.0
    %619 = vmatprep.subr.mxu0 0.0
    %620 = vmatpush1.msra.mxu0 0.0
    %621 = vmatprep.subr.mxu0 0.0
    %622 = vmatpush1.msra.mxu0 0.0
    %623 = vmatprep.subr.mxu0 0.0
    %624 = vmatpush1.msra.mxu0 0.0
    %625 = vmatprep.subr.mxu0 0.0
    %626 = vmatpush1.msra.mxu0 0.0
    %627 = vmatprep.subr.mxu0 0.0
    %628 = vmatpush1.msra.mxu0 0.0
    %629 = vmatprep.subr.mxu0 0.0
    %630 = vmatpush1.msra.mxu0 0.0
    %631 = vmatprep.subr.mxu0 0.0
    %632 = vmatpush1.msra.mxu0 0.0
    %633 = vmatprep.subr.mxu0 0.0
    %634 = vmatpush1.msra.mxu0 0.0
    %635 = vmatprep.subr.mxu0 0.0
    %636 = vmatpush1.msra.mxu0 0.0
    %637 = vmatprep.subr.mxu0 0.0
    %638 = vmatpush1.msra.mxu0 0.0
    %639 = vmatprep.subr.mxu0 0.0
    %640 = vmatpush1.msra.mxu0 0.0
    %641 = vmatprep.subr.mxu0 0.0
    %642 = vmatpush1.msra.mxu0 0.0
    %643 = vmatprep.subr.mxu0 0.0
    %644 = vmatpush1.msra.mxu0 0.0
    %645 = vmatprep.subr.mxu0 0.0
    %646 = vmatpush1.msra.mxu0 0.0
    %647 = vmatprep.subr.mxu0 0.0
    %648 = vmatpush1.msra.mxu0 0.0
    %649 = vmatprep.subr.mxu0 0.0
    %650 = vmatpush1.msra.mxu0 0.0
    %651 = vmatprep.subr.mxu0 0.0
    %652 = vmatpush1.msra.mxu0 0.0
    %653 = vmatprep.subr.mxu0 0.0
    %654 = vmatpush1.msra.mxu0 0.0
    %655 = vmatprep.subr.mxu0 0.0
    %656 = vmatpush1.msra.mxu0 0.0
    %657 = vmatprep.subr.mxu0 0.0
    %658 = vmatpush1.msra.mxu0 0.0
    %659 = vmatprep.mubr.f32.mxu0 0.0
    %660 = vmatmul.mubr.f32.gmra.mrb[0].mxu0 %v593
    %v661 = vpop.f32.mrb[0].mxu0
    %v662 = vadd.f32 0.0, %v661
    %v663 = vpop.f32.mrb[0].mxu0
    %v664 = vadd.f32 0.0, %v663
    %665 = vdwg.mxu0
    %v668 = vcombine.low %v662, %v664
    %v670 = vunpack.c.l.s4 1966171168
    %v671 = vunpack.c.0.s8 %v670
    %v672 = vlaneseq
    %v673 = vshrl.u32 %v672, 7
    %v674 = vsub.s32 %v671, %v673
    %v675 = vrot.slane %v668, %v674
    %v677 = vunpack.c.l.s4 1966171168
    %v678 = vunpack.c.0.s8 %v677
    %v679 = vlaneseq
    %v680 = vshrl.u32 %v679, 7
    %v681 = vsub.s32 %v678, %v680
    %v682 = vrot.slane %v675, %v681
    %v684 = vadd.f32 %v591, %v682
    %v685 = vxor.u32 %v684, 2147483648
    %v686 = vmul.f32 %v685, 1.442695
    %v687 = vpow.pop %v686
    %v688 = vadd.f32 %v687, 1.0
    %v689 = vrcp.pop %v688
    %v690 = vmul.f32 1.0, %v689
    %v692 = vrot.slane %v684, 1
    %v694 = vtanh.pop %v692
    %695 = vrot.lane.b32.xlu0 %v684, 64
    %v696 = vpop.permute.xlu0 %695
    %v697 = vrot.slane %v696, 1
    %v699 = vxor.u32 %v697, 2147483648
    %v700 = vmul.f32 %v699, 1.442695
    %v701 = vpow.pop %v700
    %v702 = vadd.f32 %v701, 1.0
    %v703 = vrcp.pop %v702
    %v704 = vmul.f32 1.0, %v703
    %v705 = vmul.f32 %v690, %v582
    %v706 = vmul.f32 %v690, %v694
    %708 = vrot.lane.b32.xlu0 %v706, 64
    %v709 = vpop.permute.xlu0 %708
    %v711 = vadd.f32 %v705, %v709
    %v712 = vtanh.pop %v711
    %714 = vrot.lane.b32.xlu0 %v712, 64
    %v715 = vpop.permute.xlu0 %714
    %v717 = vmul.f32 %v704, %v715
    %718 = vst.msk [vmem:[#allocation2 + $0x4] sm:$0x1] %vm201, %v717
    %s719 = scalar_lea.vmem [#allocation3], 5
    %v720 = vld [vmem:[%s719] ss:$8 sm:$0x3]
    %v722 = vsel %vm74, %v717, 0
    %724 = vmatprep.subr.mxu0 %v58
    %725 = vmatpush1.msra.mxu0 %v57
    %726 = vmatprep.subr.mxu0 %v60
    %727 = vmatpush1.msra.mxu0 %v59
    %728 = vmatprep.subr.mxu0 %v62
    %729 = vmatpush1.msra.mxu0 %v61
    %730 = vmatprep.subr.mxu0 %v64
    %731 = vmatpush1.msra.mxu0 %v63
    %732 = vmatprep.subr.mxu0 %v66
    %733 = vmatpush1.msra.mxu0 %v65
    %734 = vmatprep.subr.mxu0 %v68
    %735 = vmatpush1.msra.mxu0 %v67
    %736 = vmatprep.subr.mxu0 %v70
    %737 = vmatpush1.msra.mxu0 %v69
    %738 = vmatprep.subr.mxu0 %v72
    %739 = vmatpush1.msra.mxu0 %v71
    %740 = vmatprep.subr.mxu0 0.0
    %741 = vmatpush1.msra.mxu0 0.0
    %742 = vmatprep.subr.mxu0 0.0
    %743 = vmatpush1.msra.mxu0 0.0
    %744 = vmatprep.subr.mxu0 0.0
    %745 = vmatpush1.msra.mxu0 0.0
    %746 = vmatprep.subr.mxu0 0.0
    %747 = vmatpush1.msra.mxu0 0.0
    %748 = vmatprep.subr.mxu0 0.0
    %749 = vmatpush1.msra.mxu0 0.0
    %750 = vmatprep.subr.mxu0 0.0
    %751 = vmatpush1.msra.mxu0 0.0
    %752 = vmatprep.subr.mxu0 0.0
    %753 = vmatpush1.msra.mxu0 0.0
    %754 = vmatprep.subr.mxu0 0.0
    %755 = vmatpush1.msra.mxu0 0.0
    %756 = vmatprep.subr.mxu0 0.0
    %757 = vmatpush1.msra.mxu0 0.0
    %758 = vmatprep.subr.mxu0 0.0
    %759 = vmatpush1.msra.mxu0 0.0
    %760 = vmatprep.subr.mxu0 0.0
    %761 = vmatpush1.msra.mxu0 0.0
    %762 = vmatprep.subr.mxu0 0.0
    %763 = vmatpush1.msra.mxu0 0.0
    %764 = vmatprep.subr.mxu0 0.0
    %765 = vmatpush1.msra.mxu0 0.0
    %766 = vmatprep.subr.mxu0 0.0
    %767 = vmatpush1.msra.mxu0 0.0
    %768 = vmatprep.subr.mxu0 0.0
    %769 = vmatpush1.msra.mxu0 0.0
    %770 = vmatprep.subr.mxu0 0.0
    %771 = vmatpush1.msra.mxu0 0.0
    %772 = vmatprep.subr.mxu0 0.0
    %773 = vmatpush1.msra.mxu0 0.0
    %774 = vmatprep.subr.mxu0 0.0
    %775 = vmatpush1.msra.mxu0 0.0
    %776 = vmatprep.subr.mxu0 0.0
    %777 = vmatpush1.msra.mxu0 0.0
    %778 = vmatprep.subr.mxu0 0.0
    %779 = vmatpush1.msra.mxu0 0.0
    %780 = vmatprep.subr.mxu0 0.0
    %781 = vmatpush1.msra.mxu0 0.0
    %782 = vmatprep.subr.mxu0 0.0
    %783 = vmatpush1.msra.mxu0 0.0
    %784 = vmatprep.subr.mxu0 0.0
    %785 = vmatpush1.msra.mxu0 0.0
    %786 = vmatprep.subr.mxu0 0.0
    %787 = vmatpush1.msra.mxu0 0.0
    %788 = vmatprep.mubr.f32.mxu0 0.0
    %789 = vmatmul.mubr.f32.gmra.mrb[0].mxu0 %v722
    %v790 = vpop.f32.mrb[0].mxu0
    %v791 = vadd.f32 0.0, %v790
    %v792 = vpop.f32.mrb[0].mxu0
    %v793 = vadd.f32 0.0, %v792
    %794 = vdwg.mxu0
    %v797 = vcombine.low %v791, %v793
    %v799 = vunpack.c.l.s4 1966171168
    %v800 = vunpack.c.0.s8 %v799
    %v801 = vlaneseq
    %v802 = vshrl.u32 %v801, 7
    %v803 = vsub.s32 %v800, %v802
    %v804 = vrot.slane %v797, %v803
    %v806 = vunpack.c.l.s4 1966171168
    %v807 = vunpack.c.0.s8 %v806
    %v808 = vlaneseq
    %v809 = vshrl.u32 %v808, 7
    %v810 = vsub.s32 %v807, %v809
    %v811 = vrot.slane %v804, %v810
    %v813 = vadd.f32 %v720, %v811
    %v814 = vxor.u32 %v813, 2147483648
    %v815 = vmul.f32 %v814, 1.442695
    %v816 = vpow.pop %v815
    %v817 = vadd.f32 %v816, 1.0
    %v818 = vrcp.pop %v817
    %v819 = vmul.f32 1.0, %v818
    %v821 = vrot.slane %v813, 1
    %v823 = vtanh.pop %v821
    %824 = vrot.lane.b32.xlu0 %v813, 64
    %v825 = vpop.permute.xlu0 %824
    %v826 = vrot.slane %v825, 1
    %v828 = vxor.u32 %v826, 2147483648
    %v829 = vmul.f32 %v828, 1.442695
    %v830 = vpow.pop %v829
    %v831 = vadd.f32 %v830, 1.0
    %v832 = vrcp.pop %v831
    %v833 = vmul.f32 1.0, %v832
    %v834 = vmul.f32 %v819, %v711
    %v835 = vmul.f32 %v819, %v823
    %837 = vrot.lane.b32.xlu0 %v835, 64
    %v838 = vpop.permute.xlu0 %837
    %v840 = vadd.f32 %v834, %v838
    %v841 = vtanh.pop %v840
    %843 = vrot.lane.b32.xlu0 %v841, 64
    %v844 = vpop.permute.xlu0 %843
    %v846 = vmul.f32 %v833, %v844
    %847 = vst.msk [vmem:[#allocation2 + $0x5] sm:$0x1] %vm201, %v846
    %s848 = scalar_lea.vmem [#allocation3], 6
    %v849 = vld [vmem:[%s848] ss:$8 sm:$0x3]
    %v851 = vsel %vm74, %v846, 0
    %853 = vmatprep.subr.mxu0 %v58
    %854 = vmatpush1.msra.mxu0 %v57
    %855 = vmatprep.subr.mxu0 %v60
    %856 = vmatpush1.msra.mxu0 %v59
    %857 = vmatprep.subr.mxu0 %v62
    %858 = vmatpush1.msra.mxu0 %v61
    %859 = vmatprep.subr.mxu0 %v64
    %860 = vmatpush1.msra.mxu0 %v63
    %861 = vmatprep.subr.mxu0 %v66
    %862 = vmatpush1.msra.mxu0 %v65
    %863 = vmatprep.subr.mxu0 %v68
    %864 = vmatpush1.msra.mxu0 %v67
    %865 = vmatprep.subr.mxu0 %v70
    %866 = vmatpush1.msra.mxu0 %v69
    %867 = vmatprep.subr.mxu0 %v72
    %868 = vmatpush1.msra.mxu0 %v71
    %869 = vmatprep.subr.mxu0 0.0
    %870 = vmatpush1.msra.mxu0 0.0
    %871 = vmatprep.subr.mxu0 0.0
    %872 = vmatpush1.msra.mxu0 0.0
    %873 = vmatprep.subr.mxu0 0.0
    %874 = vmatpush1.msra.mxu0 0.0
    %875 = vmatprep.subr.mxu0 0.0
    %876 = vmatpush1.msra.mxu0 0.0
    %877 = vmatprep.subr.mxu0 0.0
    %878 = vmatpush1.msra.mxu0 0.0
    %879 = vmatprep.subr.mxu0 0.0
    %880 = vmatpush1.msra.mxu0 0.0
    %881 = vmatprep.subr.mxu0 0.0
    %882 = vmatpush1.msra.mxu0 0.0
    %883 = vmatprep.subr.mxu0 0.0
    %884 = vmatpush1.msra.mxu0 0.0
    %885 = vmatprep.subr.mxu0 0.0
    %886 = vmatpush1.msra.mxu0 0.0
    %887 = vmatprep.subr.mxu0 0.0
    %888 = vmatpush1.msra.mxu0 0.0
    %889 = vmatprep.subr.mxu0 0.0
    %890 = vmatpush1.msra.mxu0 0.0
    %891 = vmatprep.subr.mxu0 0.0
    %892 = vmatpush1.msra.mxu0 0.0
    %893 = vmatprep.subr.mxu0 0.0
    %894 = vmatpush1.msra.mxu0 0.0
    %895 = vmatprep.subr.mxu0 0.0
    %896 = vmatpush1.msra.mxu0 0.0
    %897 = vmatprep.subr.mxu0 0.0
    %898 = vmatpush1.msra.mxu0 0.0
    %899 = vmatprep.subr.mxu0 0.0
    %900 = vmatpush1.msra.mxu0 0.0
    %901 = vmatprep.subr.mxu0 0.0
    %902 = vmatpush1.msra.mxu0 0.0
    %903 = vmatprep.subr.mxu0 0.0
    %904 = vmatpush1.msra.mxu0 0.0
    %905 = vmatprep.subr.mxu0 0.0
    %906 = vmatpush1.msra.mxu0 0.0
    %907 = vmatprep.subr.mxu0 0.0
    %908 = vmatpush1.msra.mxu0 0.0
    %909 = vmatprep.subr.mxu0 0.0
    %910 = vmatpush1.msra.mxu0 0.0
    %911 = vmatprep.subr.mxu0 0.0
    %912 = vmatpush1.msra.mxu0 0.0
    %913 = vmatprep.subr.mxu0 0.0
    %914 = vmatpush1.msra.mxu0 0.0
    %915 = vmatprep.subr.mxu0 0.0
    %916 = vmatpush1.msra.mxu0 0.0
    %917 = vmatprep.mubr.f32.mxu0 0.0
    %918 = vmatmul.mubr.f32.gmra.mrb[0].mxu0 %v851
    %v919 = vpop.f32.mrb[0].mxu0
    %v920 = vadd.f32 0.0, %v919
    %v921 = vpop.f32.mrb[0].mxu0
    %v922 = vadd.f32 0.0, %v921
    %923 = vdwg.mxu0
    %v926 = vcombine.low %v920, %v922
    %v928 = vunpack.c.l.s4 1966171168
    %v929 = vunpack.c.0.s8 %v928
    %v930 = vlaneseq
    %v931 = vshrl.u32 %v930, 7
    %v932 = vsub.s32 %v929, %v931
    %v933 = vrot.slane %v926, %v932
    %v935 = vunpack.c.l.s4 1966171168
    %v936 = vunpack.c.0.s8 %v935
    %v937 = vlaneseq
    %v938 = vshrl.u32 %v937, 7
    %v939 = vsub.s32 %v936, %v938
    %v940 = vrot.slane %v933, %v939
    %v942 = vadd.f32 %v849, %v940
    %v943 = vxor.u32 %v942, 2147483648
    %v944 = vmul.f32 %v943, 1.442695
    %v945 = vpow.pop %v944
    %v946 = vadd.f32 %v945, 1.0
    %v947 = vrcp.pop %v946
    %v948 = vmul.f32 1.0, %v947
    %v950 = vrot.slane %v942, 1
    %v952 = vtanh.pop %v950
    %953 = vrot.lane.b32.xlu0 %v942, 64
    %v954 = vpop.permute.xlu0 %953
    %v955 = vrot.slane %v954, 1
    %v957 = vxor.u32 %v955, 2147483648
    %v958 = vmul.f32 %v957, 1.442695
    %v959 = vpow.pop %v958
    %v960 = vadd.f32 %v959, 1.0
    %v961 = vrcp.pop %v960
    %v962 = vmul.f32 1.0, %v961
    %v963 = vmul.f32 %v948, %v840
    %v964 = vmul.f32 %v948, %v952
    %966 = vrot.lane.b32.xlu0 %v964, 64
    %v967 = vpop.permute.xlu0 %966
    %v969 = vadd.f32 %v963, %v967
    %v970 = vtanh.pop %v969
    %972 = vrot.lane.b32.xlu0 %v970, 64
    %v973 = vpop.permute.xlu0 %972
    %v975 = vmul.f32 %v962, %v973
    %976 = vst.msk [vmem:[#allocation2 + $0x6] sm:$0x1] %vm201, %v975
    %s977 = scalar_lea.vmem [#allocation3], 7
    %v978 = vld [vmem:[%s977] ss:$8 sm:$0x3]
    %v980 = vsel %vm74, %v975, 0
    %982 = vmatprep.subr.mxu0 %v58
    %983 = vmatpush1.msra.mxu0 %v57
    %984 = vmatprep.subr.mxu0 %v60
    %985 = vmatpush1.msra.mxu0 %v59
    %986 = vmatprep.subr.mxu0 %v62
    %987 = vmatpush1.msra.mxu0 %v61
    %988 = vmatprep.subr.mxu0 %v64
    %989 = vmatpush1.msra.mxu0 %v63
    %990 = vmatprep.subr.mxu0 %v66
    %991 = vmatpush1.msra.mxu0 %v65
    %992 = vmatprep.subr.mxu0 %v68
    %993 = vmatpush1.msra.mxu0 %v67
    %994 = vmatprep.subr.mxu0 %v70
    %995 = vmatpush1.msra.mxu0 %v69
    %996 = vmatprep.subr.mxu0 %v72
    %997 = vmatpush1.msra.mxu0 %v71
    %998 = vmatprep.subr.mxu0 0.0
    %999 = vmatpush1.msra.mxu0 0.0
    %1000 = vmatprep.subr.mxu0 0.0
    %1001 = vmatpush1.msra.mxu0 0.0
    %1002 = vmatprep.subr.mxu0 0.0
    %1003 = vmatpush1.msra.mxu0 0.0
    %1004 = vmatprep.subr.mxu0 0.0
    %1005 = vmatpush1.msra.mxu0 0.0
    %1006 = vmatprep.subr.mxu0 0.0
    %1007 = vmatpush1.msra.mxu0 0.0
    %1008 = vmatprep.subr.mxu0 0.0
    %1009 = vmatpush1.msra.mxu0 0.0
    %1010 = vmatprep.subr.mxu0 0.0
    %1011 = vmatpush1.msra.mxu0 0.0
    %1012 = vmatprep.subr.mxu0 0.0
    %1013 = vmatpush1.msra.mxu0 0.0
    %1014 = vmatprep.subr.mxu0 0.0
    %1015 = vmatpush1.msra.mxu0 0.0
    %1016 = vmatprep.subr.mxu0 0.0
    %1017 = vmatpush1.msra.mxu0 0.0
    %1018 = vmatprep.subr.mxu0 0.0
    %1019 = vmatpush1.msra.mxu0 0.0
    %1020 = vmatprep.subr.mxu0 0.0
    %1021 = vmatpush1.msra.mxu0 0.0
    %1022 = vmatprep.subr.mxu0 0.0
    %1023 = vmatpush1.msra.mxu0 0.0
    %1024 = vmatprep.subr.mxu0 0.0
    %1025 = vmatpush1.msra.mxu0 0.0
    %1026 = vmatprep.subr.mxu0 0.0
    %1027 = vmatpush1.msra.mxu0 0.0
    %1028 = vmatprep.subr.mxu0 0.0
    %1029 = vmatpush1.msra.mxu0 0.0
    %1030 = vmatprep.subr.mxu0 0.0
    %1031 = vmatpush1.msra.mxu0 0.0
    %1032 = vmatprep.subr.mxu0 0.0
    %1033 = vmatpush1.msra.mxu0 0.0
    %1034 = vmatprep.subr.mxu0 0.0
    %1035 = vmatpush1.msra.mxu0 0.0
    %1036 = vmatprep.subr.mxu0 0.0
    %1037 = vmatpush1.msra.mxu0 0.0
    %1038 = vmatprep.subr.mxu0 0.0
    %1039 = vmatpush1.msra.mxu0 0.0
    %1040 = vmatprep.subr.mxu0 0.0
    %1041 = vmatpush1.msra.mxu0 0.0
    %1042 = vmatprep.subr.mxu0 0.0
    %1043 = vmatpush1.msra.mxu0 0.0
    %1044 = vmatprep.subr.mxu0 0.0
    %1045 = vmatpush1.msra.mxu0 0.0
    %1046 = vmatprep.mubr.f32.mxu0 0.0
    %1047 = vmatmul.mubr.f32.gmra.mrb[0].mxu0 %v980
    %v1048 = vpop.f32.mrb[0].mxu0
    %v1049 = vadd.f32 0.0, %v1048
    %v1050 = vpop.f32.mrb[0].mxu0
    %v1051 = vadd.f32 0.0, %v1050
    %1052 = vdwg.mxu0
    %v1055 = vcombine.low %v1049, %v1051
    %v1057 = vunpack.c.l.s4 1966171168
    %v1058 = vunpack.c.0.s8 %v1057
    %v1059 = vlaneseq
    %v1060 = vshrl.u32 %v1059, 7
    %v1061 = vsub.s32 %v1058, %v1060
    %v1062 = vrot.slane %v1055, %v1061
    %v1064 = vunpack.c.l.s4 1966171168
    %v1065 = vunpack.c.0.s8 %v1064
    %v1066 = vlaneseq
    %v1067 = vshrl.u32 %v1066, 7
    %v1068 = vsub.s32 %v1065, %v1067
    %v1069 = vrot.slane %v1062, %v1068
    %v1071 = vadd.f32 %v978, %v1069
    %v1072 = vxor.u32 %v1071, 2147483648
    %v1073 = vmul.f32 %v1072, 1.442695
    %v1074 = vpow.pop %v1073
    %v1075 = vadd.f32 %v1074, 1.0
    %v1076 = vrcp.pop %v1075
    %v1077 = vmul.f32 1.0, %v1076
    %v1079 = vrot.slane %v1071, 1
    %v1081 = vtanh.pop %v1079
    %1082 = vrot.lane.b32.xlu0 %v1071, 64
    %v1083 = vpop.permute.xlu0 %1082
    %v1084 = vrot.slane %v1083, 1
    %v1086 = vxor.u32 %v1084, 2147483648
    %v1087 = vmul.f32 %v1086, 1.442695
    %v1088 = vpow.pop %v1087
    %v1089 = vadd.f32 %v1088, 1.0
    %v1090 = vrcp.pop %v1089
    %v1091 = vmul.f32 1.0, %v1090
    %v1092 = vmul.f32 %v1077, %v969
    %v1093 = vmul.f32 %v1077, %v1081
    %1095 = vrot.lane.b32.xlu0 %v1093, 64
    %v1096 = vpop.permute.xlu0 %1095
    %v1098 = vadd.f32 %v1092, %v1096
    %v1099 = vtanh.pop %v1098
    %1101 = vrot.lane.b32.xlu0 %v1099, 64
    %v1102 = vpop.permute.xlu0 %1101
    %v1104 = vmul.f32 %v1091, %v1102
    %1105 = vst.msk [vmem:[#allocation2 + $0x7] sm:$0x1] %vm201, %v1104
    %v1106 = vld [vmem:[#allocation2] sm:$0xff]
    %v1107 = vld [vmem:[#allocation8] sm:$0xff]
    %v1108 = vld [vmem:[#allocation8 + $0x8] sm:$0xff]
    %v1109 = vld [vmem:[#allocation8 + $0x10] sm:$0xff]
    %v1110 = vld [vmem:[#allocation8 + $0x18] sm:$0xff]
    %v1111 = vld [vmem:[#allocation8 + $0x20] sm:$0xff]
    %v1112 = vld [vmem:[#allocation8 + $0x28] sm:$0xff]
    %v1113 = vld [vmem:[#allocation8 + $0x30] sm:$0xff]
    %v1114 = vld [vmem:[#allocation8 + $0x38] sm:$0xff]
    %v1115 = vld [vmem:[%s3] sm:$0x1]
    %v1117 = vlaneseq
    %v1118 = vshrl.u32 %v1117, 7
    %v1119 = vsub.s32 0, %v1118
    %v1120 = vrot.slane %v1115, %v1119
    %v1123 = vsel %vm74, %v1106, 0
    %1125 = vmatprep.subr.mxu0 0.0
    %1126 = vmatpush1.msra.mxu0 %v1107
    %1127 = vmatprep.subr.mxu0 0.0
    %1128 = vmatpush1.msra.mxu0 %v1108
    %1129 = vmatprep.subr.mxu0 0.0
    %1130 = vmatpush1.msra.mxu0 %v1109
    %1131 = vmatprep.subr.mxu0 0.0
    %1132 = vmatpush1.msra.mxu0 %v1110
    %1133 = vmatprep.subr.mxu0 0.0
    %1134 = vmatpush1.msra.mxu0 %v1111
    %1135 = vmatprep.subr.mxu0 0.0
    %1136 = vmatpush1.msra.mxu0 %v1112
    %1137 = vmatprep.subr.mxu0 0.0
    %1138 = vmatpush1.msra.mxu0 %v1113
    %1139 = vmatprep.subr.mxu0 0.0
    %1140 = vmatpush1.msra.mxu0 %v1114
    %1141 = vmatprep.subr.mxu0 0.0
    %1142 = vmatpush1.msra.mxu0 0.0
    %1143 = vmatprep.subr.mxu0 0.0
    %1144 = vmatpush1.msra.mxu0 0.0
    %1145 = vmatprep.subr.mxu0 0.0
    %1146 = vmatpush1.msra.mxu0 0.0
    %1147 = vmatprep.subr.mxu0 0.0
    %1148 = vmatpush1.msra.mxu0 0.0
    %1149 = vmatprep.subr.mxu0 0.0
    %1150 = vmatpush1.msra.mxu0 0.0
    %1151 = vmatprep.subr.mxu0 0.0
    %1152 = vmatpush1.msra.mxu0 0.0
    %1153 = vmatprep.subr.mxu0 0.0
    %1154 = vmatpush1.msra.mxu0 0.0
    %1155 = vmatprep.subr.mxu0 0.0
    %1156 = vmatpush1.msra.mxu0 0.0
    %1157 = vmatprep.subr.mxu0 0.0
    %1158 = vmatpush1.msra.mxu0 0.0
    %1159 = vmatprep.subr.mxu0 0.0
    %1160 = vmatpush1.msra.mxu0 0.0
    %1161 = vmatprep.subr.mxu0 0.0
    %1162 = vmatpush1.msra.mxu0 0.0
    %1163 = vmatprep.subr.mxu0 0.0
    %1164 = vmatpush1.msra.mxu0 0.0
    %1165 = vmatprep.subr.mxu0 0.0
    %1166 = vmatpush1.msra.mxu0 0.0
    %1167 = vmatprep.subr.mxu0 0.0
    %1168 = vmatpush1.msra.mxu0 0.0
    %1169 = vmatprep.subr.mxu0 0.0
    %1170 = vmatpush1.msra.mxu0 0.0
    %1171 = vmatprep.subr.mxu0 0.0
    %1172 = vmatpush1.msra.mxu0 0.0
    %1173 = vmatprep.subr.mxu0 0.0
    %1174 = vmatpush1.msra.mxu0 0.0
    %1175 = vmatprep.subr.mxu0 0.0
    %1176 = vmatpush1.msra.mxu0 0.0
    %1177 = vmatprep.subr.mxu0 0.0
    %1178 = vmatpush1.msra.mxu0 0.0
    %1179 = vmatprep.subr.mxu0 0.0
    %1180 = vmatpush1.msra.mxu0 0.0
    %1181 = vmatprep.subr.mxu0 0.0
    %1182 = vmatpush1.msra.mxu0 0.0
    %1183 = vmatprep.subr.mxu0 0.0
    %1184 = vmatpush1.msra.mxu0 0.0
    %1185 = vmatprep.subr.mxu0 0.0
    %1186 = vmatpush1.msra.mxu0 0.0
    %1187 = vmatprep.subr.mxu0 0.0
    %1188 = vmatpush1.msra.mxu0 0.0
    %1189 = vmatprep.mubr.f32.mxu0 0.0
    %1190 = vmatmul.mubr.f32.gmra.mrb[0].mxu0 %v1123
    %v1191 = vpop.f32.mrb[0].mxu0
    %v1192 = vadd.f32 %v1120, %v1191
    %v1193 = vpop.f32.mrb[0].mxu0
    %1194 = vdwg.mxu0
    %1195 = vst [vmem:[#allocation9] sm:$0xff] %v1192
    // Predicated region
    $region30: #{tpu_custom_call.1} parent=1 // pred_check
      _
    $region31: #{tpu_custom_call.1} parent=1 // pred_check_branch
      %1197 = sbr.rel (0) target = $region33
    $region32: #{tpu_custom_call.1} parent=1 // pred_region
      %s1199 = ssub.s32 128, 128
      %1200 = vsyncadd [#allocation5], %s1199
      %s1202 = sshll.u32 [#allocation9], 4
      %s1203 = int_to_ptr.vmem [resolvable:$true] %s1202
      %1205 = dma.vmem_to_hbm [thread:$0]  %s1203, 128, %s4, [#allocation5]
    $region33: #{tpu_custom_call.1} parent=1 // pred_fallthru
      _
    // Predicated region
    $region34: #{tpu_custom_call.1} parent=1 // pred_check
      _
    $region35: #{tpu_custom_call.1} parent=1 // pred_check_branch
      %1207 = sbr.rel (0) target = $region37
    $region36: #{tpu_custom_call.1} parent=1 // pred_region
      %1208 = dma.done [#allocation5], 128
    $region37: #{tpu_custom_call.1} parent=1 // pred_fallthru
      _
    %1209 = vsyncpa [#allocation4], 1
    %1210 = vsyncpa [#allocation7], 1
    %1211 = vsyncpa [#allocation5], 1

</llo_original>
